<compile_context>
chip_gen: v7x
topology: tpu7x:2x2x1
jax: 0.10.0
libtpu: 0.0.40
codegen_flags: <defaults>
</compile_context>

<pallas_src>
import jax
import jax.numpy as jnp
from jax import lax
from jax.experimental import pallas as pl
from jax.experimental.pallas import tpu as pltpu

IN_DIM = 512        # fc1 input  (nn.Linear(512, inter_dim))
INTER_DIM = 500     # fc1 output / fc2 input (logical)
INTER_PAD = 512     # lane-dense padded intermediate (zero-padded, exact math)
OUT_DIM = 300       # fc2 output / LayerNorm dim
LN_EPS = 1e-5       # torch.nn.LayerNorm default eps


def _round_up(a, b):
    return (a + b - 1) // b * b


def image_encoder_kernel(x_ref, w1_ref, b1_ref, w2_ref, b2_ref,
                         gamma_ref, beta_ref, o_ref):
    # x arrives as f32 straight from HBM; cast to bf16 on the VPU in-kernel
    # (hidden under the MXU/HBM bottleneck) instead of a separate XLA pass.
    xb = x_ref[...].astype(jnp.bfloat16)

    # ---- fc1: (tm, 512)bf16 @ (512, 512)bf16 -> f32 acc, + b1 ----
    h = jnp.dot(xb, w1_ref[...],
                preferred_element_type=jnp.float32) + b1_ref[...]

    # ---- fc2: (tm, 512)bf16 @ (512, 300)bf16 -> f32 acc, + b2 ----
    y = jnp.dot(h.astype(jnp.bfloat16), w2_ref[...],
                preferred_element_type=jnp.float32) + b2_ref[...]

    # ---- LayerNorm over last dim (exactly 300 cols), elementwise affine ----
    # Two-pass centered form kept for numerics (the VPU/XLU work hides under
    # the MXU/HBM bottleneck on v6e/v7x anyway).
    mean = jnp.mean(y, axis=-1, keepdims=True)
    centered = y - mean
    var = jnp.mean(centered * centered, axis=-1, keepdims=True)
    # rsqrt on the EUP; fuse gamma into the per-row scale.
    scale = lax.rsqrt(var + LN_EPS) * gamma_ref[...]
    o_ref[...] = (centered * scale + beta_ref[...]).astype(o_ref.dtype)


def image_encoder(x, w1_p, b1_p, w2_p, b2_p, gamma, beta, *, tm=1024):
    """x: (N, 512) float32. Params already padded/prepared (see prepare_params).
    Returns (N, 300) float32."""
    n, in_dim = x.shape
    assert in_dim == IN_DIM

    # Tile selection:
    #   * default tm=1024 (best measured HBM-roofline fraction),
    #   * never more than ~half the batch (rounded to 16 for bf16 sublane
    #     packing) so v7x's two TensorCores each get >=1 grid step,
    #   * tiny batches get a tiny tile instead of being padded up.
    half = -(-n // 2)
    tm = min(tm, _round_up(half, 16))
    tm = max(tm, 16)

    grid = (pl.cdiv(n, tm),)

    # Batch axis is tiled (ragged last block handled by Pallas' bounded DMAs);
    # feature axes are full-extent blocks.  Constant index_maps keep the tiny
    # weight set resident in VMEM across grid steps.
    x_spec = pl.BlockSpec((tm, IN_DIM), lambda i: (i, 0))
    w1_spec = pl.BlockSpec((IN_DIM, INTER_PAD), lambda i: (0, 0))
    b1_spec = pl.BlockSpec((1, INTER_PAD), lambda i: (0, 0))
    w2_spec = pl.BlockSpec((INTER_PAD, OUT_DIM), lambda i: (0, 0))
    b2_spec = pl.BlockSpec((1, OUT_DIM), lambda i: (0, 0))
    g_spec = pl.BlockSpec((1, OUT_DIM), lambda i: (0, 0))
    beta_spec = pl.BlockSpec((1, OUT_DIM), lambda i: (0, 0))
    o_spec = pl.BlockSpec((tm, OUT_DIM), lambda i: (i, 0))

    out = pl.pallas_call(
        image_encoder_kernel,
        out_shape=jax.ShapeDtypeStruct((n, OUT_DIM), jnp.float32),
        grid_spec=pltpu.PrefetchScalarGridSpec(
            num_scalar_prefetch=0,
            grid=grid,
            in_specs=[x_spec, w1_spec, b1_spec, w2_spec, b2_spec,
                      g_spec, beta_spec],
            out_specs=o_spec,
        ),
        compiler_params=pltpu.CompilerParams(
            dimension_semantics=("parallel",),
            vmem_limit_bytes=32 * 1024 * 1024,
        ),
    )(x, w1_p, b1_p, w2_p, b2_p, gamma, beta)

    return out


def init_params(key):
    """Deterministic synthetic parameters in PyTorch layout/shapes."""
    k1, k2, k3, k4 = jax.random.split(key, 4)
    w1 = jax.random.normal(k1, (INTER_DIM, IN_DIM), jnp.float32) * 0.02   # (out,in)
    b1 = jax.random.normal(k2, (INTER_DIM,), jnp.float32) * 0.02
    w2 = jax.random.normal(k3, (OUT_DIM, INTER_DIM), jnp.float32) * 0.02  # (out,in)
    b2 = jax.random.normal(k4, (OUT_DIM,), jnp.float32) * 0.02
    gamma = jnp.ones((OUT_DIM,), jnp.float32)    # LayerNorm default weight
    beta = jnp.zeros((OUT_DIM,), jnp.float32)    # LayerNorm default bias
    return w1, b1, w2, b2, gamma, beta


def prepare_params(w1, b1, w2, b2, gamma, beta):
    """Torch-layout f32 params -> kernel layout: transposed, padded 500->512,
    matmul weights in bf16, biases/affine in f32. One-time host prep."""
    pad_i = INTER_PAD - INTER_DIM
    # fc1: (out,in) -> (in,out), pad output cols 500->512 with zeros.
    w1_p = jnp.pad(w1.T, ((0, 0), (0, pad_i))).astype(jnp.bfloat16)       # (512,512)
    b1_p = jnp.pad(b1, (0, pad_i)).reshape(1, -1).astype(jnp.float32)     # (1,512)
    # fc2: (out,in) -> (in,out), pad contraction rows 500->512 with zeros.
    w2_p = jnp.pad(w2.T, ((0, pad_i), (0, 0))).astype(jnp.bfloat16)       # (512,300)
    b2_p = b2.reshape(1, -1).astype(jnp.float32)                          # (1,300)
    gamma_p = gamma.reshape(1, -1).astype(jnp.float32)                    # (1,300)
    beta_p = beta.reshape(1, -1).astype(jnp.float32)                      # (1,300)
    return w1_p, b1_p, w2_p, b2_p, gamma_p, beta_p


def reference(x, w1, b1, w2, b2, gamma, beta):
    """Pure f32 reference matching the PyTorch forward()."""
    h = x @ w1.T + b1
    y = h @ w2.T + b2
    mean = jnp.mean(y, axis=-1, keepdims=True)
    var = jnp.mean((y - mean) ** 2, axis=-1, keepdims=True)
    return (y - mean) / jnp.sqrt(var + LN_EPS) * gamma + beta


if __name__ == "__main__":
    key = jax.random.PRNGKey(0)
    kx, kp = jax.random.split(key)

    torch_params = init_params(kp)
    kernel_params = prepare_params(*torch_params)

    # Small batch of box features.
    N = 8
    x = jax.random.normal(kx, (N, IN_DIM), jnp.float32)

    out = image_encoder(x, *kernel_params)
    out = jax.block_until_ready(out)
    ref = reference(x, *torch_params)

    assert out.shape == (N, OUT_DIM)
    # bf16 matmuls vs f32 reference -> loosened tolerance.
    err = float(jnp.max(jnp.abs(out - ref)))
    assert err < 5e-2, f"max abs err {err}"

    # Non-multiple batch exercises the ragged (cdiv) grid path.
    N2 = 300
    x2 = jax.random.normal(jax.random.PRNGKey(1), (N2, IN_DIM), jnp.float32)
    out2 = jax.block_until_ready(image_encoder(x2, *kernel_params))
    ref2 = reference(x2, *torch_params)
    assert out2.shape == (N2, OUT_DIM)
    err2 = float(jnp.max(jnp.abs(out2 - ref2)))
    assert err2 < 5e-2, f"max abs err {err2}"

    print("KERNEL_OK")
</pallas_src>

<mosaic_0001>
module attributes {stable_mosaic.version = 11 : i64} {
  func.func @image_encoder_kernel(%arg0: i32, %arg1: memref<16x512xf32, #tpu.memory_space<vmem>>, %arg2: memref<512x512xbf16, #tpu.memory_space<vmem>>, %arg3: memref<1x512xf32, #tpu.memory_space<vmem>>, %arg4: memref<512x300xbf16, #tpu.memory_space<vmem>>, %arg5: memref<1x300xf32, #tpu.memory_space<vmem>>, %arg6: memref<1x300xf32, #tpu.memory_space<vmem>>, %arg7: memref<1x300xf32, #tpu.memory_space<vmem>>, %arg8: memref<16x300xf32, #tpu.memory_space<vmem>>) attributes {dimension_semantics = [#tpu.dimension_semantics<parallel>], iteration_bounds = array<i64: 1>, scalar_prefetch = 0 : i64, scratch_operands = 0 : i64, tpu.core_type = #tpu.core_type<tc>, window_params = [{transform_indices = @transform_0, window_bounds = array<i64: 16, 512>}, {pipeline_mode = #tpu.pipeline_mode<synchronous>, transform_indices = @transform_1, window_bounds = array<i64: 512, 512>}, {pipeline_mode = #tpu.pipeline_mode<synchronous>, transform_indices = @transform_2, window_bounds = array<i64: 1, 512>}, {pipeline_mode = #tpu.pipeline_mode<synchronous>, transform_indices = @transform_3, window_bounds = array<i64: 512, 300>}, {pipeline_mode = #tpu.pipeline_mode<synchronous>, transform_indices = @transform_4, window_bounds = array<i64: 1, 300>}, {pipeline_mode = #tpu.pipeline_mode<synchronous>, transform_indices = @transform_5, window_bounds = array<i64: 1, 300>}, {pipeline_mode = #tpu.pipeline_mode<synchronous>, transform_indices = @transform_6, window_bounds = array<i64: 1, 300>}, {transform_indices = @transform_7, window_bounds = array<i64: 16, 300>}]} {
    %c0 = arith.constant 0 : index
    %c0_0 = arith.constant 0 : index
    %0 = vector.load %arg1[%c0, %c0_0] : memref<16x512xf32, #tpu.memory_space<vmem>>, vector<16x512xf32>
    %1 = arith.truncf %0 : vector<16x512xf32> to vector<16x512xbf16>
    %c0_1 = arith.constant 0 : index
    %c0_2 = arith.constant 0 : index
    %2 = vector.load %arg2[%c0_1, %c0_2] : memref<512x512xbf16, #tpu.memory_space<vmem>>, vector<512x512xbf16>
    %cst = arith.constant dense<0.000000e+00> : vector<16x512xf32>
    %3 = tpu.matmul %1, %2, %cst {dimension_numbers = #tpu.dot_dimension_numbers<[1], [0], [0], [1], [0, 0, 1, 1], [], []>} : vector<16x512xbf16>, vector<512x512xbf16>, vector<16x512xf32> -> vector<16x512xf32>
    %c0_3 = arith.constant 0 : index
    %c0_4 = arith.constant 0 : index
    %4 = vector.load %arg3[%c0_3, %c0_4] : memref<1x512xf32, #tpu.memory_space<vmem>>, vector<1x512xf32>
    %5 = vector.broadcast %4 : vector<1x512xf32> to vector<16x512xf32>
    %6 = arith.addf %3, %5 : vector<16x512xf32>
    %7 = arith.truncf %6 : vector<16x512xf32> to vector<16x512xbf16>
    %c0_5 = arith.constant 0 : index
    %c0_6 = arith.constant 0 : index
    %8 = vector.load %arg4[%c0_5, %c0_6] : memref<512x300xbf16, #tpu.memory_space<vmem>>, vector<512x300xbf16>
    %cst_7 = arith.constant dense<0.000000e+00> : vector<16x300xf32>
    %9 = tpu.matmul %7, %8, %cst_7 {dimension_numbers = #tpu.dot_dimension_numbers<[1], [0], [0], [1], [0, 0, 1, 1], [], []>} : vector<16x512xbf16>, vector<512x300xbf16>, vector<16x300xf32> -> vector<16x300xf32>
    %c0_8 = arith.constant 0 : index
    %c0_9 = arith.constant 0 : index
    %10 = vector.load %arg5[%c0_8, %c0_9] : memref<1x300xf32, #tpu.memory_space<vmem>>, vector<1x300xf32>
    %11 = vector.broadcast %10 : vector<1x300xf32> to vector<16x300xf32>
    %12 = arith.addf %9, %11 : vector<16x300xf32>
    %cst_10 = arith.constant dense<0.000000e+00> : vector<16xf32>
    %13 = vector.multi_reduction <add>, %12, %cst_10 [1] : vector<16x300xf32> to vector<16xf32>
    %14 = vector.shape_cast %13 : vector<16xf32> to vector<16x1xf32>
    %cst_11 = arith.constant 3.000000e+02 : f32
    %15 = vector.broadcast %cst_11 : f32 to vector<16x1xf32>
    %16 = arith.divf %14, %15 : vector<16x1xf32>
    %17 = vector.broadcast %16 : vector<16x1xf32> to vector<16x300xf32>
    %18 = arith.subf %12, %17 : vector<16x300xf32>
    %19 = arith.mulf %18, %18 : vector<16x300xf32>
    %cst_12 = arith.constant dense<0.000000e+00> : vector<16xf32>
    %20 = vector.multi_reduction <add>, %19, %cst_12 [1] : vector<16x300xf32> to vector<16xf32>
    %21 = vector.shape_cast %20 : vector<16xf32> to vector<16x1xf32>
    %cst_13 = arith.constant 3.000000e+02 : f32
    %22 = vector.broadcast %cst_13 : f32 to vector<16x1xf32>
    %23 = arith.divf %21, %22 : vector<16x1xf32>
    %cst_14 = arith.constant 9.99999974E-6 : f32
    %24 = vector.broadcast %cst_14 : f32 to vector<16x1xf32>
    %25 = arith.addf %23, %24 : vector<16x1xf32>
    %26 = math.rsqrt %25 : vector<16x1xf32>
    %c0_15 = arith.constant 0 : index
    %c0_16 = arith.constant 0 : index
    %27 = vector.load %arg6[%c0_15, %c0_16] : memref<1x300xf32, #tpu.memory_space<vmem>>, vector<1x300xf32>
    %28 = vector.broadcast %26 : vector<16x1xf32> to vector<16x300xf32>
    %29 = vector.broadcast %27 : vector<1x300xf32> to vector<16x300xf32>
    %30 = arith.mulf %28, %29 : vector<16x300xf32>
    %31 = arith.mulf %18, %30 : vector<16x300xf32>
    %c0_17 = arith.constant 0 : index
    %c0_18 = arith.constant 0 : index
    %32 = vector.load %arg7[%c0_17, %c0_18] : memref<1x300xf32, #tpu.memory_space<vmem>>, vector<1x300xf32>
    %33 = vector.broadcast %32 : vector<1x300xf32> to vector<16x300xf32>
    %34 = arith.addf %31, %33 : vector<16x300xf32>
    %c0_19 = arith.constant 0 : index
    %c0_20 = arith.constant 0 : index
    %35 = vector.load %arg8[%c0_19, %c0_20] : memref<16x300xf32, #tpu.memory_space<vmem>>, vector<16x300xf32>
    tpu.vector_store %arg8[%c0_19, %c0_20], %34 {strides = array<i32>} : memref<16x300xf32, #tpu.memory_space<vmem>>, vector<16x300xf32>,
    return
  }
  func.func @transform_0(%arg0: i32) -> (i32, i32) {
    %c0_i32 = arith.constant 0 : i32
    %c0_i32_0 = arith.constant 0 : i32
    return %arg0, %c0_i32 : i32, i32
  }
  func.func @transform_1(%arg0: i32) -> (i32, i32) {
    %c0_i32 = arith.constant 0 : i32
    %c0_i32_0 = arith.constant 0 : i32
    %c0_i32_1 = arith.constant 0 : i32
    return %c0_i32, %c0_i32_0 : i32, i32
  }
  func.func @transform_2(%arg0: i32) -> (i32, i32) {
    %c0_i32 = arith.constant 0 : i32
    %c0_i32_0 = arith.constant 0 : i32
    %c0_i32_1 = arith.constant 0 : i32
    return %c0_i32, %c0_i32_0 : i32, i32
  }
  func.func @transform_3(%arg0: i32) -> (i32, i32) {
    %c0_i32 = arith.constant 0 : i32
    %c0_i32_0 = arith.constant 0 : i32
    %c0_i32_1 = arith.constant 0 : i32
    return %c0_i32, %c0_i32_0 : i32, i32
  }
  func.func @transform_4(%arg0: i32) -> (i32, i32) {
    %c0_i32 = arith.constant 0 : i32
    %c0_i32_0 = arith.constant 0 : i32
    %c0_i32_1 = arith.constant 0 : i32
    return %c0_i32, %c0_i32_0 : i32, i32
  }
  func.func @transform_5(%arg0: i32) -> (i32, i32) {
    %c0_i32 = arith.constant 0 : i32
    %c0_i32_0 = arith.constant 0 : i32
    %c0_i32_1 = arith.constant 0 : i32
    return %c0_i32, %c0_i32_0 : i32, i32
  }
  func.func @transform_6(%arg0: i32) -> (i32, i32) {
    %c0_i32 = arith.constant 0 : i32
    %c0_i32_0 = arith.constant 0 : i32
    %c0_i32_1 = arith.constant 0 : i32
    return %c0_i32, %c0_i32_0 : i32, i32
  }
  func.func @transform_7(%arg0: i32) -> (i32, i32) {
    %c0_i32 = arith.constant 0 : i32
    %c0_i32_0 = arith.constant 0 : i32
    return %arg0, %c0_i32 : i32, i32
  }
}

</mosaic_0001>

<llo_original>
// kernel: tpu_custom_call.1
$region0: #{tpu_custom_call.1}
  #allocation0 [shape = 'u32[]', space=smem, size = 0x4, offset = 0x4, fixed_abs, tag = 'smem constant byte address 0x4 - core index']
  #allocation1 [shape = 'u32[144,128]{1,0:T(1,128)}', space=vmem, size = 0x12000, scoped, tag = 'internal scratch']
  %s0 = inlined_call_operand.vmem [shape: f32[8,512], index: 0, kind: input, shape index: {}]
  %s1 = inlined_call_operand.vmem [shape: bf16[512,512], index: 1, kind: input, shape index: {}]
  %s2 = inlined_call_operand.vmem [shape: f32[1,512], index: 2, kind: input, shape index: {}]
  %s3 = inlined_call_operand.vmem [shape: bf16[512,300], index: 3, kind: input, shape index: {}]
  %s4 = inlined_call_operand.vmem [shape: f32[1,300], index: 4, kind: input, shape index: {}]
  %s5 = inlined_call_operand.vmem [shape: f32[1,300], index: 5, kind: input, shape index: {}]
  %s6 = inlined_call_operand.vmem [shape: f32[1,300], index: 6, kind: input, shape index: {}]
  %s7 = inlined_call_operand.hbm [shape: f32[8,300], index: 7, kind: output, shape index: {}]
  %s8 = sld [smem:[#allocation0]]
  $region38: #{tpu_custom_call.1} parent=0
    _
  %s10 = ssub.s32 1, %s8
  %s11 = scalar_select 0, %s10, %s8
  $region1: #{tpu_custom_call.1} parent=0
    #allocation2 [shape = 'u8[24576]{0}', space=vmem, size = 0x6000, scoped, tag = 'output window, operand 0, single buffered']
    #allocation3 [shape = 's32[1]{0}', space=sflag, size = 0x4, scoped, tag = 'scoped memory for tpu_custom_call.1']
    %12 = vsyncpa [#allocation3], 0
    // Predicated region
    $region2: #{tpu_custom_call.1} parent=1 // pred_check
      _
    $region3: #{tpu_custom_call.1} parent=1 // pred_check_branch
      %14 = sbr.rel (0) target = $region5
    $region4: #{tpu_custom_call.1} parent=1 // pred_region
      _
    $region5: #{tpu_custom_call.1} parent=1 // pred_fallthru
      _
    // Predicated region
    $region6: #{tpu_custom_call.1} parent=1 // pred_check
      _
    $region7: #{tpu_custom_call.1} parent=1 // pred_check_branch
      %16 = sbr.rel (0) target = $region9
    $region8: #{tpu_custom_call.1} parent=1 // pred_region
      _
    $region9: #{tpu_custom_call.1} parent=1 // pred_fallthru
      _
    // Predicated region
    $region10: #{tpu_custom_call.1} parent=1 // pred_check
      _
    $region11: #{tpu_custom_call.1} parent=1 // pred_check_branch
      %18 = sbr.rel (0) target = $region13
    $region12: #{tpu_custom_call.1} parent=1 // pred_region
      _
    $region13: #{tpu_custom_call.1} parent=1 // pred_fallthru
      _
    // Predicated region
    $region14: #{tpu_custom_call.1} parent=1 // pred_check
      _
    $region15: #{tpu_custom_call.1} parent=1 // pred_check_branch
      %20 = sbr.rel (0) target = $region17
    $region16: #{tpu_custom_call.1} parent=1 // pred_region
      _
    $region17: #{tpu_custom_call.1} parent=1 // pred_fallthru
      _
    // Predicated region
    $region18: #{tpu_custom_call.1} parent=1 // pred_check
      _
    $region19: #{tpu_custom_call.1} parent=1 // pred_check_branch
      %22 = sbr.rel (0) target = $region21
    $region20: #{tpu_custom_call.1} parent=1 // pred_region
      _
    $region21: #{tpu_custom_call.1} parent=1 // pred_fallthru
      _
    // Predicated region
    $region22: #{tpu_custom_call.1} parent=1 // pred_check
      _
    $region23: #{tpu_custom_call.1} parent=1 // pred_check_branch
      %24 = sbr.rel (0) target = $region25
    $region24: #{tpu_custom_call.1} parent=1 // pred_region
      _
    $region25: #{tpu_custom_call.1} parent=1 // pred_fallthru
      _
    // Predicated region
    $region26: #{tpu_custom_call.1} parent=1 // pred_check
      _
    $region27: #{tpu_custom_call.1} parent=1 // pred_check_branch
      %26 = sbr.rel (0) target = $region29
    $region28: #{tpu_custom_call.1} parent=1 // pred_region
      _
    $region29: #{tpu_custom_call.1} parent=1 // pred_fallthru
      _
    %v28 = vld [vmem:[%s0] sm:$0xff]
    %v29 = vld [vmem:[%s0 + $0x8] sm:$0xff]
    %v30 = vld [vmem:[%s0 + $0x10] sm:$0xff]
    %v31 = vld [vmem:[%s0 + $0x18] sm:$0xff]
    %v32 = vld [vmem:[%s0 + $0x20] sm:$0xff]
    %v33 = vld [vmem:[%s0 + $0x28] sm:$0xff]
    %v34 = vld [vmem:[%s0 + $0x30] sm:$0xff]
    %v35 = vld [vmem:[%s0 + $0x38] sm:$0xff]
    %v36 = vpack.c.bf16 %v32, %v28
    %v37 = vpack.c.bf16 %v33, %v29
    %v38 = vpack.c.bf16 %v34, %v30
    %v39 = vpack.c.bf16 %v35, %v31
    %v40 = vld [vmem:[%s1] sm:$0xff]
    %v41 = vld [vmem:[%s1 + $0x8] sm:$0xff]
    %v42 = vld [vmem:[%s1 + $0x10] sm:$0xff]
    %v43 = vld [vmem:[%s1 + $0x18] sm:$0xff]
    %v44 = vld [vmem:[%s1 + $0x20] sm:$0xff]
    %v45 = vld [vmem:[%s1 + $0x28] sm:$0xff]
    %v46 = vld [vmem:[%s1 + $0x30] sm:$0xff]
    %v47 = vld [vmem:[%s1 + $0x38] sm:$0xff]
    %v48 = vld [vmem:[%s1 + $0x40] sm:$0xff]
    %v49 = vld [vmem:[%s1 + $0x48] sm:$0xff]
    %v50 = vld [vmem:[%s1 + $0x50] sm:$0xff]
    %v51 = vld [vmem:[%s1 + $0x58] sm:$0xff]
    %v52 = vld [vmem:[%s1 + $0x60] sm:$0xff]
    %v53 = vld [vmem:[%s1 + $0x68] sm:$0xff]
    %v54 = vld [vmem:[%s1 + $0x70] sm:$0xff]
    %v55 = vld [vmem:[%s1 + $0x78] sm:$0xff]
    %v56 = vld [vmem:[%s1 + $0x80] sm:$0xff]
    %v57 = vld [vmem:[%s1 + $0x88] sm:$0xff]
    %v58 = vld [vmem:[%s1 + $0x90] sm:$0xff]
    %v59 = vld [vmem:[%s1 + $0x98] sm:$0xff]
    %v60 = vld [vmem:[%s1 + $0xa0] sm:$0xff]
    %v61 = vld [vmem:[%s1 + $0xa8] sm:$0xff]
    %v62 = vld [vmem:[%s1 + $0xb0] sm:$0xff]
    %v63 = vld [vmem:[%s1 + $0xb8] sm:$0xff]
    %v64 = vld [vmem:[%s1 + $0xc0] sm:$0xff]
    %v65 = vld [vmem:[%s1 + $0xc8] sm:$0xff]
    %v66 = vld [vmem:[%s1 + $0xd0] sm:$0xff]
    %v67 = vld [vmem:[%s1 + $0xd8] sm:$0xff]
    %v68 = vld [vmem:[%s1 + $0xe0] sm:$0xff]
    %v69 = vld [vmem:[%s1 + $0xe8] sm:$0xff]
    %v70 = vld [vmem:[%s1 + $0xf0] sm:$0xff]
    %v71 = vld [vmem:[%s1 + $0xf8] sm:$0xff]
    %v72 = vld [vmem:[%s1 + $0x100] sm:$0xff]
    %v73 = vld [vmem:[%s1 + $0x108] sm:$0xff]
    %v74 = vld [vmem:[%s1 + $0x110] sm:$0xff]
    %v75 = vld [vmem:[%s1 + $0x118] sm:$0xff]
    %v76 = vld [vmem:[%s1 + $0x120] sm:$0xff]
    %v77 = vld [vmem:[%s1 + $0x128] sm:$0xff]
    %v78 = vld [vmem:[%s1 + $0x130] sm:$0xff]
    %v79 = vld [vmem:[%s1 + $0x138] sm:$0xff]
    %v80 = vld [vmem:[%s1 + $0x140] sm:$0xff]
    %v81 = vld [vmem:[%s1 + $0x148] sm:$0xff]
    %v82 = vld [vmem:[%s1 + $0x150] sm:$0xff]
    %v83 = vld [vmem:[%s1 + $0x158] sm:$0xff]
    %v84 = vld [vmem:[%s1 + $0x160] sm:$0xff]
    %v85 = vld [vmem:[%s1 + $0x168] sm:$0xff]
    %v86 = vld [vmem:[%s1 + $0x170] sm:$0xff]
    %v87 = vld [vmem:[%s1 + $0x178] sm:$0xff]
    %v88 = vld [vmem:[%s1 + $0x180] sm:$0xff]
    %v89 = vld [vmem:[%s1 + $0x188] sm:$0xff]
    %v90 = vld [vmem:[%s1 + $0x190] sm:$0xff]
    %v91 = vld [vmem:[%s1 + $0x198] sm:$0xff]
    %v92 = vld [vmem:[%s1 + $0x1a0] sm:$0xff]
    %v93 = vld [vmem:[%s1 + $0x1a8] sm:$0xff]
    %v94 = vld [vmem:[%s1 + $0x1b0] sm:$0xff]
    %v95 = vld [vmem:[%s1 + $0x1b8] sm:$0xff]
    %v96 = vld [vmem:[%s1 + $0x1c0] sm:$0xff]
    %v97 = vld [vmem:[%s1 + $0x1c8] sm:$0xff]
    %v98 = vld [vmem:[%s1 + $0x1d0] sm:$0xff]
    %v99 = vld [vmem:[%s1 + $0x1d8] sm:$0xff]
    %v100 = vld [vmem:[%s1 + $0x1e0] sm:$0xff]
    %v101 = vld [vmem:[%s1 + $0x1e8] sm:$0xff]
    %v102 = vld [vmem:[%s1 + $0x1f0] sm:$0xff]
    %v103 = vld [vmem:[%s1 + $0x1f8] sm:$0xff]
    %v104 = vld [vmem:[%s1 + $0x200] sm:$0xff]
    %v105 = vld [vmem:[%s1 + $0x208] sm:$0xff]
    %v106 = vld [vmem:[%s1 + $0x210] sm:$0xff]
    %v107 = vld [vmem:[%s1 + $0x218] sm:$0xff]
    %v108 = vld [vmem:[%s1 + $0x220] sm:$0xff]
    %v109 = vld [vmem:[%s1 + $0x228] sm:$0xff]
    %v110 = vld [vmem:[%s1 + $0x230] sm:$0xff]
    %v111 = vld [vmem:[%s1 + $0x238] sm:$0xff]
    %v112 = vld [vmem:[%s1 + $0x240] sm:$0xff]
    %v113 = vld [vmem:[%s1 + $0x248] sm:$0xff]
    %v114 = vld [vmem:[%s1 + $0x250] sm:$0xff]
    %v115 = vld [vmem:[%s1 + $0x258] sm:$0xff]
    %v116 = vld [vmem:[%s1 + $0x260] sm:$0xff]
    %v117 = vld [vmem:[%s1 + $0x268] sm:$0xff]
    %v118 = vld [vmem:[%s1 + $0x270] sm:$0xff]
    %v119 = vld [vmem:[%s1 + $0x278] sm:$0xff]
    %v120 = vld [vmem:[%s1 + $0x280] sm:$0xff]
    %v121 = vld [vmem:[%s1 + $0x288] sm:$0xff]
    %v122 = vld [vmem:[%s1 + $0x290] sm:$0xff]
    %v123 = vld [vmem:[%s1 + $0x298] sm:$0xff]
    %v124 = vld [vmem:[%s1 + $0x2a0] sm:$0xff]
    %v125 = vld [vmem:[%s1 + $0x2a8] sm:$0xff]
    %v126 = vld [vmem:[%s1 + $0x2b0] sm:$0xff]
    %v127 = vld [vmem:[%s1 + $0x2b8] sm:$0xff]
    %v128 = vld [vmem:[%s1 + $0x2c0] sm:$0xff]
    %v129 = vld [vmem:[%s1 + $0x2c8] sm:$0xff]
    %v130 = vld [vmem:[%s1 + $0x2d0] sm:$0xff]
    %v131 = vld [vmem:[%s1 + $0x2d8] sm:$0xff]
    %v132 = vld [vmem:[%s1 + $0x2e0] sm:$0xff]
    %v133 = vld [vmem:[%s1 + $0x2e8] sm:$0xff]
    %v134 = vld [vmem:[%s1 + $0x2f0] sm:$0xff]
    %v135 = vld [vmem:[%s1 + $0x2f8] sm:$0xff]
    %v136 = vld [vmem:[%s1 + $0x300] sm:$0xff]
    %v137 = vld [vmem:[%s1 + $0x308] sm:$0xff]
    %v138 = vld [vmem:[%s1 + $0x310] sm:$0xff]
    %v139 = vld [vmem:[%s1 + $0x318] sm:$0xff]
    %v140 = vld [vmem:[%s1 + $0x320] sm:$0xff]
    %v141 = vld [vmem:[%s1 + $0x328] sm:$0xff]
    %v142 = vld [vmem:[%s1 + $0x330] sm:$0xff]
    %v143 = vld [vmem:[%s1 + $0x338] sm:$0xff]
    %v144 = vld [vmem:[%s1 + $0x340] sm:$0xff]
    %v145 = vld [vmem:[%s1 + $0x348] sm:$0xff]
    %v146 = vld [vmem:[%s1 + $0x350] sm:$0xff]
    %v147 = vld [vmem:[%s1 + $0x358] sm:$0xff]
    %v148 = vld [vmem:[%s1 + $0x360] sm:$0xff]
    %v149 = vld [vmem:[%s1 + $0x368] sm:$0xff]
    %v150 = vld [vmem:[%s1 + $0x370] sm:$0xff]
    %v151 = vld [vmem:[%s1 + $0x378] sm:$0xff]
    %v152 = vld [vmem:[%s1 + $0x380] sm:$0xff]
    %v153 = vld [vmem:[%s1 + $0x388] sm:$0xff]
    %v154 = vld [vmem:[%s1 + $0x390] sm:$0xff]
    %v155 = vld [vmem:[%s1 + $0x398] sm:$0xff]
    %v156 = vld [vmem:[%s1 + $0x3a0] sm:$0xff]
    %v157 = vld [vmem:[%s1 + $0x3a8] sm:$0xff]
    %v158 = vld [vmem:[%s1 + $0x3b0] sm:$0xff]
    %v159 = vld [vmem:[%s1 + $0x3b8] sm:$0xff]
    %v160 = vld [vmem:[%s1 + $0x3c0] sm:$0xff]
    %v161 = vld [vmem:[%s1 + $0x3c8] sm:$0xff]
    %v162 = vld [vmem:[%s1 + $0x3d0] sm:$0xff]
    %v163 = vld [vmem:[%s1 + $0x3d8] sm:$0xff]
    %v164 = vld [vmem:[%s1 + $0x3e0] sm:$0xff]
    %v165 = vld [vmem:[%s1 + $0x3e8] sm:$0xff]
    %v166 = vld [vmem:[%s1 + $0x3f0] sm:$0xff]
    %v167 = vld [vmem:[%s1 + $0x3f8] sm:$0xff]
    %v168 = vld [vmem:[%s2] sm:$0xf]
    %v170 = vlaneseq
    %v171 = vshrl.u32 %v170, 7
    %v172 = vsub.s32 0, %v171
    %v173 = vrot.slane %v168, %v172
    %v174 = vlaneseq
    %v175 = vshrl.u32 %v174, 7
    %v176 = vsub.s32 1, %v175
    %v177 = vrot.slane %v168, %v176
    %v178 = vlaneseq
    %v179 = vshrl.u32 %v178, 7
    %v180 = vsub.s32 2, %v179
    %v181 = vrot.slane %v168, %v180
    %v182 = vlaneseq
    %v183 = vshrl.u32 %v182, 7
    %v184 = vsub.s32 3, %v183
    %v185 = vrot.slane %v168, %v184
    %v318 = vunpack.c.l.b16 %v40
    %v319 = vunpack.c.h.b16 %v40
    %v320 = vunpack.c.l.b16 %v41
    %v321 = vunpack.c.h.b16 %v41
    %v322 = vunpack.c.l.b16 %v42
    %v323 = vunpack.c.h.b16 %v42
    %v324 = vunpack.c.l.b16 %v43
    %v325 = vunpack.c.h.b16 %v43
    %v326 = vunpack.c.l.b16 %v44
    %v327 = vunpack.c.h.b16 %v44
    %v328 = vunpack.c.l.b16 %v45
    %v329 = vunpack.c.h.b16 %v45
    %v330 = vunpack.c.l.b16 %v46
    %v331 = vunpack.c.h.b16 %v46
    %v332 = vunpack.c.l.b16 %v47
    %v333 = vunpack.c.h.b16 %v47
    %v334 = vunpack.c.l.b16 %v48
    %v335 = vunpack.c.h.b16 %v48
    %v336 = vunpack.c.l.b16 %v49
    %v337 = vunpack.c.h.b16 %v49
    %v338 = vunpack.c.l.b16 %v50
    %v339 = vunpack.c.h.b16 %v50
    %v340 = vunpack.c.l.b16 %v51
    %v341 = vunpack.c.h.b16 %v51
    %v342 = vunpack.c.l.b16 %v52
    %v343 = vunpack.c.h.b16 %v52
    %v344 = vunpack.c.l.b16 %v53
    %v345 = vunpack.c.h.b16 %v53
    %v346 = vunpack.c.l.b16 %v54
    %v347 = vunpack.c.h.b16 %v54
    %v348 = vunpack.c.l.b16 %v55
    %v349 = vunpack.c.h.b16 %v55
    %v350 = vunpack.c.l.b16 %v56
    %v351 = vunpack.c.h.b16 %v56
    %v352 = vunpack.c.l.b16 %v57
    %v353 = vunpack.c.h.b16 %v57
    %v354 = vunpack.c.l.b16 %v58
    %v355 = vunpack.c.h.b16 %v58
    %v356 = vunpack.c.l.b16 %v59
    %v357 = vunpack.c.h.b16 %v59
    %v358 = vunpack.c.l.b16 %v60
    %v359 = vunpack.c.h.b16 %v60
    %v360 = vunpack.c.l.b16 %v61
    %v361 = vunpack.c.h.b16 %v61
    %v362 = vunpack.c.l.b16 %v62
    %v363 = vunpack.c.h.b16 %v62
    %v364 = vunpack.c.l.b16 %v63
    %v365 = vunpack.c.h.b16 %v63
    %v366 = vunpack.c.l.b16 %v64
    %v367 = vunpack.c.h.b16 %v64
    %v368 = vunpack.c.l.b16 %v65
    %v369 = vunpack.c.h.b16 %v65
    %v370 = vunpack.c.l.b16 %v66
    %v371 = vunpack.c.h.b16 %v66
    %v372 = vunpack.c.l.b16 %v67
    %v373 = vunpack.c.h.b16 %v67
    %v374 = vunpack.c.l.b16 %v68
    %v375 = vunpack.c.h.b16 %v68
    %v376 = vunpack.c.l.b16 %v69
    %v377 = vunpack.c.h.b16 %v69
    %v378 = vunpack.c.l.b16 %v70
    %v379 = vunpack.c.h.b16 %v70
    %v380 = vunpack.c.l.b16 %v71
    %v381 = vunpack.c.h.b16 %v71
    %v382 = vunpack.c.l.b16 %v72
    %v383 = vunpack.c.h.b16 %v72
    %v384 = vunpack.c.l.b16 %v73
    %v385 = vunpack.c.h.b16 %v73
    %v386 = vunpack.c.l.b16 %v74
    %v387 = vunpack.c.h.b16 %v74
    %v388 = vunpack.c.l.b16 %v75
    %v389 = vunpack.c.h.b16 %v75
    %v390 = vunpack.c.l.b16 %v76
    %v391 = vunpack.c.h.b16 %v76
    %v392 = vunpack.c.l.b16 %v77
    %v393 = vunpack.c.h.b16 %v77
    %v394 = vunpack.c.l.b16 %v78
    %v395 = vunpack.c.h.b16 %v78
    %v396 = vunpack.c.l.b16 %v79
    %v397 = vunpack.c.h.b16 %v79
    %v398 = vunpack.c.l.b16 %v80
    %v399 = vunpack.c.h.b16 %v80
    %v400 = vunpack.c.l.b16 %v81
    %v401 = vunpack.c.h.b16 %v81
    %v402 = vunpack.c.l.b16 %v82
    %v403 = vunpack.c.h.b16 %v82
    %v404 = vunpack.c.l.b16 %v83
    %v405 = vunpack.c.h.b16 %v83
    %v406 = vunpack.c.l.b16 %v84
    %v407 = vunpack.c.h.b16 %v84
    %v408 = vunpack.c.l.b16 %v85
    %v409 = vunpack.c.h.b16 %v85
    %v410 = vunpack.c.l.b16 %v86
    %v411 = vunpack.c.h.b16 %v86
    %v412 = vunpack.c.l.b16 %v87
    %v413 = vunpack.c.h.b16 %v87
    %v414 = vunpack.c.l.b16 %v88
    %v415 = vunpack.c.h.b16 %v88
    %v416 = vunpack.c.l.b16 %v89
    %v417 = vunpack.c.h.b16 %v89
    %v418 = vunpack.c.l.b16 %v90
    %v419 = vunpack.c.h.b16 %v90
    %v420 = vunpack.c.l.b16 %v91
    %v421 = vunpack.c.h.b16 %v91
    %v422 = vunpack.c.l.b16 %v92
    %v423 = vunpack.c.h.b16 %v92
    %v424 = vunpack.c.l.b16 %v93
    %v425 = vunpack.c.h.b16 %v93
    %v426 = vunpack.c.l.b16 %v94
    %v427 = vunpack.c.h.b16 %v94
    %v428 = vunpack.c.l.b16 %v95
    %v429 = vunpack.c.h.b16 %v95
    %v430 = vunpack.c.l.b16 %v96
    %v431 = vunpack.c.h.b16 %v96
    %v432 = vunpack.c.l.b16 %v97
    %v433 = vunpack.c.h.b16 %v97
    %v434 = vunpack.c.l.b16 %v98
    %v435 = vunpack.c.h.b16 %v98
    %v436 = vunpack.c.l.b16 %v99
    %v437 = vunpack.c.h.b16 %v99
    %v438 = vunpack.c.l.b16 %v100
    %v439 = vunpack.c.h.b16 %v100
    %v440 = vunpack.c.l.b16 %v101
    %v441 = vunpack.c.h.b16 %v101
    %v442 = vunpack.c.l.b16 %v102
    %v443 = vunpack.c.h.b16 %v102
    %v444 = vunpack.c.l.b16 %v103
    %v445 = vunpack.c.h.b16 %v103
    %v446 = vunpack.c.l.b16 %v104
    %v447 = vunpack.c.h.b16 %v104
    %v448 = vunpack.c.l.b16 %v105
    %v449 = vunpack.c.h.b16 %v105
    %v450 = vunpack.c.l.b16 %v106
    %v451 = vunpack.c.h.b16 %v106
    %v452 = vunpack.c.l.b16 %v107
    %v453 = vunpack.c.h.b16 %v107
    %v454 = vunpack.c.l.b16 %v108
    %v455 = vunpack.c.h.b16 %v108
    %v456 = vunpack.c.l.b16 %v109
    %v457 = vunpack.c.h.b16 %v109
    %v458 = vunpack.c.l.b16 %v110
    %v459 = vunpack.c.h.b16 %v110
    %v460 = vunpack.c.l.b16 %v111
    %v461 = vunpack.c.h.b16 %v111
    %v462 = vunpack.c.l.b16 %v112
    %v463 = vunpack.c.h.b16 %v112
    %v464 = vunpack.c.l.b16 %v113
    %v465 = vunpack.c.h.b16 %v113
    %v466 = vunpack.c.l.b16 %v114
    %v467 = vunpack.c.h.b16 %v114
    %v468 = vunpack.c.l.b16 %v115
    %v469 = vunpack.c.h.b16 %v115
    %v470 = vunpack.c.l.b16 %v116
    %v471 = vunpack.c.h.b16 %v116
    %v472 = vunpack.c.l.b16 %v117
    %v473 = vunpack.c.h.b16 %v117
    %v474 = vunpack.c.l.b16 %v118
    %v475 = vunpack.c.h.b16 %v118
    %v476 = vunpack.c.l.b16 %v119
    %v477 = vunpack.c.h.b16 %v119
    %v478 = vunpack.c.l.b16 %v120
    %v479 = vunpack.c.h.b16 %v120
    %v480 = vunpack.c.l.b16 %v121
    %v481 = vunpack.c.h.b16 %v121
    %v482 = vunpack.c.l.b16 %v122
    %v483 = vunpack.c.h.b16 %v122
    %v484 = vunpack.c.l.b16 %v123
    %v485 = vunpack.c.h.b16 %v123
    %v486 = vunpack.c.l.b16 %v124
    %v487 = vunpack.c.h.b16 %v124
    %v488 = vunpack.c.l.b16 %v125
    %v489 = vunpack.c.h.b16 %v125
    %v490 = vunpack.c.l.b16 %v126
    %v491 = vunpack.c.h.b16 %v126
    %v492 = vunpack.c.l.b16 %v127
    %v493 = vunpack.c.h.b16 %v127
    %v494 = vunpack.c.l.b16 %v128
    %v495 = vunpack.c.h.b16 %v128
    %v496 = vunpack.c.l.b16 %v129
    %v497 = vunpack.c.h.b16 %v129
    %v498 = vunpack.c.l.b16 %v130
    %v499 = vunpack.c.h.b16 %v130
    %v500 = vunpack.c.l.b16 %v131
    %v501 = vunpack.c.h.b16 %v131
    %v502 = vunpack.c.l.b16 %v132
    %v503 = vunpack.c.h.b16 %v132
    %v504 = vunpack.c.l.b16 %v133
    %v505 = vunpack.c.h.b16 %v133
    %v506 = vunpack.c.l.b16 %v134
    %v507 = vunpack.c.h.b16 %v134
    %v508 = vunpack.c.l.b16 %v135
    %v509 = vunpack.c.h.b16 %v135
    %v510 = vunpack.c.l.b16 %v136
    %v511 = vunpack.c.h.b16 %v136
    %v512 = vunpack.c.l.b16 %v137
    %v513 = vunpack.c.h.b16 %v137
    %v514 = vunpack.c.l.b16 %v138
    %v515 = vunpack.c.h.b16 %v138
    %v516 = vunpack.c.l.b16 %v139
    %v517 = vunpack.c.h.b16 %v139
    %v518 = vunpack.c.l.b16 %v140
    %v519 = vunpack.c.h.b16 %v140
    %v520 = vunpack.c.l.b16 %v141
    %v521 = vunpack.c.h.b16 %v141
    %v522 = vunpack.c.l.b16 %v142
    %v523 = vunpack.c.h.b16 %v142
    %v524 = vunpack.c.l.b16 %v143
    %v525 = vunpack.c.h.b16 %v143
    %v526 = vunpack.c.l.b16 %v144
    %v527 = vunpack.c.h.b16 %v144
    %v528 = vunpack.c.l.b16 %v145
    %v529 = vunpack.c.h.b16 %v145
    %v530 = vunpack.c.l.b16 %v146
    %v531 = vunpack.c.h.b16 %v146
    %v532 = vunpack.c.l.b16 %v147
    %v533 = vunpack.c.h.b16 %v147
    %v534 = vunpack.c.l.b16 %v148
    %v535 = vunpack.c.h.b16 %v148
    %v536 = vunpack.c.l.b16 %v149
    %v537 = vunpack.c.h.b16 %v149
    %v538 = vunpack.c.l.b16 %v150
    %v539 = vunpack.c.h.b16 %v150
    %v540 = vunpack.c.l.b16 %v151
    %v541 = vunpack.c.h.b16 %v151
    %v542 = vunpack.c.l.b16 %v152
    %v543 = vunpack.c.h.b16 %v152
    %v544 = vunpack.c.l.b16 %v153
    %v545 = vunpack.c.h.b16 %v153
    %v546 = vunpack.c.l.b16 %v154
    %v547 = vunpack.c.h.b16 %v154
    %v548 = vunpack.c.l.b16 %v155
    %v549 = vunpack.c.h.b16 %v155
    %v550 = vunpack.c.l.b16 %v156
    %v551 = vunpack.c.h.b16 %v156
    %v552 = vunpack.c.l.b16 %v157
    %v553 = vunpack.c.h.b16 %v157
    %v554 = vunpack.c.l.b16 %v158
    %v555 = vunpack.c.h.b16 %v158
    %v556 = vunpack.c.l.b16 %v159
    %v557 = vunpack.c.h.b16 %v159
    %v558 = vunpack.c.l.b16 %v160
    %v559 = vunpack.c.h.b16 %v160
    %v560 = vunpack.c.l.b16 %v161
    %v561 = vunpack.c.h.b16 %v161
    %v562 = vunpack.c.l.b16 %v162
    %v563 = vunpack.c.h.b16 %v162
    %v564 = vunpack.c.l.b16 %v163
    %v565 = vunpack.c.h.b16 %v163
    %v566 = vunpack.c.l.b16 %v164
    %v567 = vunpack.c.h.b16 %v164
    %v568 = vunpack.c.l.b16 %v165
    %v569 = vunpack.c.h.b16 %v165
    %v570 = vunpack.c.l.b16 %v166
    %v571 = vunpack.c.h.b16 %v166
    %v572 = vunpack.c.l.b16 %v167
    %v573 = vunpack.c.h.b16 %v167
    %v574 = vpack.c.b16 %v322, %v318
    %v575 = vpack.c.b16 %v323, %v319
    %v576 = vpack.c.b16 %v324, %v320
    %v577 = vpack.c.b16 %v325, %v321
    %v578 = vpack.c.b16 %v330, %v326
    %v579 = vpack.c.b16 %v331, %v327
    %v580 = vpack.c.b16 %v332, %v328
    %v581 = vpack.c.b16 %v333, %v329
    %v582 = vpack.c.b16 %v338, %v334
    %v583 = vpack.c.b16 %v339, %v335
    %v584 = vpack.c.b16 %v340, %v336
    %v585 = vpack.c.b16 %v341, %v337
    %v586 = vpack.c.b16 %v346, %v342
    %v587 = vpack.c.b16 %v347, %v343
    %v588 = vpack.c.b16 %v348, %v344
    %v589 = vpack.c.b16 %v349, %v345
    %v590 = vpack.c.b16 %v354, %v350
    %v591 = vpack.c.b16 %v355, %v351
    %v592 = vpack.c.b16 %v356, %v352
    %v593 = vpack.c.b16 %v357, %v353
    %v594 = vpack.c.b16 %v362, %v358
    %v595 = vpack.c.b16 %v363, %v359
    %v596 = vpack.c.b16 %v364, %v360
    %v597 = vpack.c.b16 %v365, %v361
    %v598 = vpack.c.b16 %v370, %v366
    %v599 = vpack.c.b16 %v371, %v367
    %v600 = vpack.c.b16 %v372, %v368
    %v601 = vpack.c.b16 %v373, %v369
    %v602 = vpack.c.b16 %v378, %v374
    %v603 = vpack.c.b16 %v379, %v375
    %v604 = vpack.c.b16 %v380, %v376
    %v605 = vpack.c.b16 %v381, %v377
    %v606 = vpack.c.b16 %v386, %v382
    %v607 = vpack.c.b16 %v387, %v383
    %v608 = vpack.c.b16 %v388, %v384
    %v609 = vpack.c.b16 %v389, %v385
    %v610 = vpack.c.b16 %v394, %v390
    %v611 = vpack.c.b16 %v395, %v391
    %v612 = vpack.c.b16 %v396, %v392
    %v613 = vpack.c.b16 %v397, %v393
    %v614 = vpack.c.b16 %v402, %v398
    %v615 = vpack.c.b16 %v403, %v399
    %v616 = vpack.c.b16 %v404, %v400
    %v617 = vpack.c.b16 %v405, %v401
    %v618 = vpack.c.b16 %v410, %v406
    %v619 = vpack.c.b16 %v411, %v407
    %v620 = vpack.c.b16 %v412, %v408
    %v621 = vpack.c.b16 %v413, %v409
    %v622 = vpack.c.b16 %v418, %v414
    %v623 = vpack.c.b16 %v419, %v415
    %v624 = vpack.c.b16 %v420, %v416
    %v625 = vpack.c.b16 %v421, %v417
    %v626 = vpack.c.b16 %v426, %v422
    %v627 = vpack.c.b16 %v427, %v423
    %v628 = vpack.c.b16 %v428, %v424
    %v629 = vpack.c.b16 %v429, %v425
    %v630 = vpack.c.b16 %v434, %v430
    %v631 = vpack.c.b16 %v435, %v431
    %v632 = vpack.c.b16 %v436, %v432
    %v633 = vpack.c.b16 %v437, %v433
    %v634 = vpack.c.b16 %v442, %v438
    %v635 = vpack.c.b16 %v443, %v439
    %v636 = vpack.c.b16 %v444, %v440
    %v637 = vpack.c.b16 %v445, %v441
    %v638 = vpack.c.b16 %v450, %v446
    %v639 = vpack.c.b16 %v451, %v447
    %v640 = vpack.c.b16 %v452, %v448
    %v641 = vpack.c.b16 %v453, %v449
    %v642 = vpack.c.b16 %v458, %v454
    %v643 = vpack.c.b16 %v459, %v455
    %v644 = vpack.c.b16 %v460, %v456
    %v645 = vpack.c.b16 %v461, %v457
    %v646 = vpack.c.b16 %v466, %v462
    %v647 = vpack.c.b16 %v467, %v463
    %v648 = vpack.c.b16 %v468, %v464
    %v649 = vpack.c.b16 %v469, %v465
    %v650 = vpack.c.b16 %v474, %v470
    %v651 = vpack.c.b16 %v475, %v471
    %v652 = vpack.c.b16 %v476, %v472
    %v653 = vpack.c.b16 %v477, %v473
    %v654 = vpack.c.b16 %v482, %v478
    %v655 = vpack.c.b16 %v483, %v479
    %v656 = vpack.c.b16 %v484, %v480
    %v657 = vpack.c.b16 %v485, %v481
    %v658 = vpack.c.b16 %v490, %v486
    %v659 = vpack.c.b16 %v491, %v487
    %v660 = vpack.c.b16 %v492, %v488
    %v661 = vpack.c.b16 %v493, %v489
    %v662 = vpack.c.b16 %v498, %v494
    %v663 = vpack.c.b16 %v499, %v495
    %v664 = vpack.c.b16 %v500, %v496
    %v665 = vpack.c.b16 %v501, %v497
    %v666 = vpack.c.b16 %v506, %v502
    %v667 = vpack.c.b16 %v507, %v503
    %v668 = vpack.c.b16 %v508, %v504
    %v669 = vpack.c.b16 %v509, %v505
    %v670 = vpack.c.b16 %v514, %v510
    %v671 = vpack.c.b16 %v515, %v511
    %v672 = vpack.c.b16 %v516, %v512
    %v673 = vpack.c.b16 %v517, %v513
    %v674 = vpack.c.b16 %v522, %v518
    %v675 = vpack.c.b16 %v523, %v519
    %v676 = vpack.c.b16 %v524, %v520
    %v677 = vpack.c.b16 %v525, %v521
    %v678 = vpack.c.b16 %v530, %v526
    %v679 = vpack.c.b16 %v531, %v527
    %v680 = vpack.c.b16 %v532, %v528
    %v681 = vpack.c.b16 %v533, %v529
    %v682 = vpack.c.b16 %v538, %v534
    %v683 = vpack.c.b16 %v539, %v535
    %v684 = vpack.c.b16 %v540, %v536
    %v685 = vpack.c.b16 %v541, %v537
    %v686 = vpack.c.b16 %v546, %v542
    %v687 = vpack.c.b16 %v547, %v543
    %v688 = vpack.c.b16 %v548, %v544
    %v689 = vpack.c.b16 %v549, %v545
    %v690 = vpack.c.b16 %v554, %v550
    %v691 = vpack.c.b16 %v555, %v551
    %v692 = vpack.c.b16 %v556, %v552
    %v693 = vpack.c.b16 %v557, %v553
    %v694 = vpack.c.b16 %v562, %v558
    %v695 = vpack.c.b16 %v563, %v559
    %v696 = vpack.c.b16 %v564, %v560
    %v697 = vpack.c.b16 %v565, %v561
    %v698 = vpack.c.b16 %v570, %v566
    %v699 = vpack.c.b16 %v571, %v567
    %v700 = vpack.c.b16 %v572, %v568
    %v701 = vpack.c.b16 %v573, %v569
    %830 = vmatprep.subr.bf16.mxu0 %v575
    %831 = vmatpush1.bf16.msra.mxu0 %v574
    %832 = vmatprep.subr.bf16.mxu0 %v579
    %833 = vmatpush1.bf16.msra.mxu0 %v578
    %834 = vmatprep.subr.bf16.mxu0 %v583
    %835 = vmatpush1.bf16.msra.mxu0 %v582
    %836 = vmatprep.subr.bf16.mxu0 %v587
    %837 = vmatpush1.bf16.msra.mxu0 %v586
    %838 = vmatprep.subr.bf16.mxu0 %v591
    %839 = vmatpush1.bf16.msra.mxu0 %v590
    %840 = vmatprep.subr.bf16.mxu0 %v595
    %841 = vmatpush1.bf16.msra.mxu0 %v594
    %842 = vmatprep.subr.bf16.mxu0 %v599
    %843 = vmatpush1.bf16.msra.mxu0 %v598
    %844 = vmatprep.subr.bf16.mxu0 %v603
    %845 = vmatpush1.bf16.msra.mxu0 %v602
    %846 = vmatprep.subr.bf16.mxu0 %v607
    %847 = vmatpush1.bf16.msra.mxu0 %v606
    %848 = vmatprep.subr.bf16.mxu0 %v611
    %849 = vmatpush1.bf16.msra.mxu0 %v610
    %850 = vmatprep.subr.bf16.mxu0 %v615
    %851 = vmatpush1.bf16.msra.mxu0 %v614
    %852 = vmatprep.subr.bf16.mxu0 %v619
    %853 = vmatpush1.bf16.msra.mxu0 %v618
    %854 = vmatprep.subr.bf16.mxu0 %v623
    %855 = vmatpush1.bf16.msra.mxu0 %v622
    %856 = vmatprep.subr.bf16.mxu0 %v627
    %857 = vmatpush1.bf16.msra.mxu0 %v626
    %858 = vmatprep.subr.bf16.mxu0 %v631
    %859 = vmatpush1.bf16.msra.mxu0 %v630
    %860 = vmatprep.subr.bf16.mxu0 %v635
    %861 = vmatpush1.bf16.msra.mxu0 %v634
    %862 = vmatprep.mubr.bf16.mxu0 %v37
    %863 = vmatmul.mubr.bf16.gmra.mrb[0].mxu0 %v36
    %v864 = vpop.f32.mrb[0].mxu0
    %v865 = vadd.f32 %v173, %v864
    %v866 = vpop.f32.mrb[0].mxu0
    %v867 = vadd.f32 %v177, %v866
    %v868 = vpop.f32.mrb[0].mxu0
    %v869 = vadd.f32 %v173, %v868
    %v870 = vpop.f32.mrb[0].mxu0
    %v871 = vadd.f32 %v177, %v870
    %872 = vdwg.mxu0
    %873 = vmatprep.subr.bf16.mxu0 %v639
    %874 = vmatpush1.bf16.msra.mxu0 %v638
    %875 = vmatprep.subr.bf16.mxu0 %v643
    %876 = vmatpush1.bf16.msra.mxu0 %v642
    %877 = vmatprep.subr.bf16.mxu0 %v647
    %878 = vmatpush1.bf16.msra.mxu0 %v646
    %879 = vmatprep.subr.bf16.mxu0 %v651
    %880 = vmatpush1.bf16.msra.mxu0 %v650
    %881 = vmatprep.subr.bf16.mxu0 %v655
    %882 = vmatpush1.bf16.msra.mxu0 %v654
    %883 = vmatprep.subr.bf16.mxu0 %v659
    %884 = vmatpush1.bf16.msra.mxu0 %v658
    %885 = vmatprep.subr.bf16.mxu0 %v663
    %886 = vmatpush1.bf16.msra.mxu0 %v662
    %887 = vmatprep.subr.bf16.mxu0 %v667
    %888 = vmatpush1.bf16.msra.mxu0 %v666
    %889 = vmatprep.subr.bf16.mxu0 %v671
    %890 = vmatpush1.bf16.msra.mxu0 %v670
    %891 = vmatprep.subr.bf16.mxu0 %v675
    %892 = vmatpush1.bf16.msra.mxu0 %v674
    %893 = vmatprep.subr.bf16.mxu0 %v679
    %894 = vmatpush1.bf16.msra.mxu0 %v678
    %895 = vmatprep.subr.bf16.mxu0 %v683
    %896 = vmatpush1.bf16.msra.mxu0 %v682
    %897 = vmatprep.subr.bf16.mxu0 %v687
    %898 = vmatpush1.bf16.msra.mxu0 %v686
    %899 = vmatprep.subr.bf16.mxu0 %v691
    %900 = vmatpush1.bf16.msra.mxu0 %v690
    %901 = vmatprep.subr.bf16.mxu0 %v695
    %902 = vmatpush1.bf16.msra.mxu0 %v694
    %903 = vmatprep.subr.bf16.mxu0 %v699
    %904 = vmatpush1.bf16.msra.mxu0 %v698
    %905 = vmatprep.mubr.bf16.mxu0 %v39
    %906 = vmatmul.mubr.bf16.gmra.mrb[0].mxu0 %v38
    %v907 = vpop.f32.mrb[0].mxu0
    %v908 = vadd.f32 %v865, %v907
    %v909 = vpop.f32.mrb[0].mxu0
    %v910 = vadd.f32 %v867, %v909
    %v911 = vpop.f32.mrb[0].mxu0
    %v912 = vadd.f32 %v869, %v911
    %v913 = vpop.f32.mrb[0].mxu0
    %v914 = vadd.f32 %v871, %v913
    %915 = vdwg.mxu0
    %916 = vmatprep.subr.bf16.mxu0 %v577
    %917 = vmatpush1.bf16.msra.mxu0 %v576
    %918 = vmatprep.subr.bf16.mxu0 %v581
    %919 = vmatpush1.bf16.msra.mxu0 %v580
    %920 = vmatprep.subr.bf16.mxu0 %v585
    %921 = vmatpush1.bf16.msra.mxu0 %v584
    %922 = vmatprep.subr.bf16.mxu0 %v589
    %923 = vmatpush1.bf16.msra.mxu0 %v588
    %924 = vmatprep.subr.bf16.mxu0 %v593
    %925 = vmatpush1.bf16.msra.mxu0 %v592
    %926 = vmatprep.subr.bf16.mxu0 %v597
    %927 = vmatpush1.bf16.msra.mxu0 %v596
    %928 = vmatprep.subr.bf16.mxu0 %v601
    %929 = vmatpush1.bf16.msra.mxu0 %v600
    %930 = vmatprep.subr.bf16.mxu0 %v605
    %931 = vmatpush1.bf16.msra.mxu0 %v604
    %932 = vmatprep.subr.bf16.mxu0 %v609
    %933 = vmatpush1.bf16.msra.mxu0 %v608
    %934 = vmatprep.subr.bf16.mxu0 %v613
    %935 = vmatpush1.bf16.msra.mxu0 %v612
    %936 = vmatprep.subr.bf16.mxu0 %v617
    %937 = vmatpush1.bf16.msra.mxu0 %v616
    %938 = vmatprep.subr.bf16.mxu0 %v621
    %939 = vmatpush1.bf16.msra.mxu0 %v620
    %940 = vmatprep.subr.bf16.mxu0 %v625
    %941 = vmatpush1.bf16.msra.mxu0 %v624
    %942 = vmatprep.subr.bf16.mxu0 %v629
    %943 = vmatpush1.bf16.msra.mxu0 %v628
    %944 = vmatprep.subr.bf16.mxu0 %v633
    %945 = vmatpush1.bf16.msra.mxu0 %v632
    %946 = vmatprep.subr.bf16.mxu0 %v637
    %947 = vmatpush1.bf16.msra.mxu0 %v636
    %948 = vmatprep.mubr.bf16.mxu0 %v37
    %949 = vmatmul.mubr.bf16.gmra.mrb[0].mxu0 %v36
    %v950 = vpop.f32.mrb[0].mxu0
    %v951 = vadd.f32 %v181, %v950
    %v952 = vpop.f32.mrb[0].mxu0
    %v953 = vadd.f32 %v185, %v952
    %v954 = vpop.f32.mrb[0].mxu0
    %v955 = vadd.f32 %v181, %v954
    %v956 = vpop.f32.mrb[0].mxu0
    %v957 = vadd.f32 %v185, %v956
    %958 = vdwg.mxu0
    %959 = vmatprep.subr.bf16.mxu0 %v641
    %960 = vmatpush1.bf16.msra.mxu0 %v640
    %961 = vmatprep.subr.bf16.mxu0 %v645
    %962 = vmatpush1.bf16.msra.mxu0 %v644
    %963 = vmatprep.subr.bf16.mxu0 %v649
    %964 = vmatpush1.bf16.msra.mxu0 %v648
    %965 = vmatprep.subr.bf16.mxu0 %v653
    %966 = vmatpush1.bf16.msra.mxu0 %v652
    %967 = vmatprep.subr.bf16.mxu0 %v657
    %968 = vmatpush1.bf16.msra.mxu0 %v656
    %969 = vmatprep.subr.bf16.mxu0 %v661
    %970 = vmatpush1.bf16.msra.mxu0 %v660
    %971 = vmatprep.subr.bf16.mxu0 %v665
    %972 = vmatpush1.bf16.msra.mxu0 %v664
    %973 = vmatprep.subr.bf16.mxu0 %v669
    %974 = vmatpush1.bf16.msra.mxu0 %v668
    %975 = vmatprep.subr.bf16.mxu0 %v673
    %976 = vmatpush1.bf16.msra.mxu0 %v672
    %977 = vmatprep.subr.bf16.mxu0 %v677
    %978 = vmatpush1.bf16.msra.mxu0 %v676
    %979 = vmatprep.subr.bf16.mxu0 %v681
    %980 = vmatpush1.bf16.msra.mxu0 %v680
    %981 = vmatprep.subr.bf16.mxu0 %v685
    %982 = vmatpush1.bf16.msra.mxu0 %v684
    %983 = vmatprep.subr.bf16.mxu0 %v689
    %984 = vmatpush1.bf16.msra.mxu0 %v688
    %985 = vmatprep.subr.bf16.mxu0 %v693
    %986 = vmatpush1.bf16.msra.mxu0 %v692
    %987 = vmatprep.subr.bf16.mxu0 %v697
    %988 = vmatpush1.bf16.msra.mxu0 %v696
    %989 = vmatprep.subr.bf16.mxu0 %v701
    %990 = vmatpush1.bf16.msra.mxu0 %v700
    %991 = vmatprep.mubr.bf16.mxu0 %v39
    %992 = vmatmul.mubr.bf16.gmra.mrb[0].mxu0 %v38
    %v993 = vpop.f32.mrb[0].mxu0
    %v994 = vadd.f32 %v951, %v993
    %v995 = vpop.f32.mrb[0].mxu0
    %v996 = vadd.f32 %v953, %v995
    %v997 = vpop.f32.mrb[0].mxu0
    %v998 = vadd.f32 %v955, %v997
    %v999 = vpop.f32.mrb[0].mxu0
    %v1000 = vadd.f32 %v957, %v999
    %1001 = vdwg.mxu0
    %v1002 = vpack.c.bf16 %v912, %v908
    %v1003 = vpack.c.bf16 %v914, %v910
    %v1004 = vpack.c.bf16 %v998, %v994
    %v1005 = vpack.c.bf16 %v1000, %v996
    %v1006 = vld [vmem:[%s3] sm:$0xff]
    %v1007 = vld [vmem:[%s3 + $0x8] sm:$0xf]
    %v1008 = vld [vmem:[%s3 + $0xc] sm:$0xff]
    %v1009 = vld [vmem:[%s3 + $0x14] sm:$0xf]
    %v1010 = vld [vmem:[%s3 + $0x18] sm:$0xff]
    %v1011 = vld [vmem:[%s3 + $0x20] sm:$0xf]
    %v1012 = vld [vmem:[%s3 + $0x24] sm:$0xff]
    %v1013 = vld [vmem:[%s3 + $0x2c] sm:$0xf]
    %v1014 = vld [vmem:[%s3 + $0x30] sm:$0xff]
    %v1015 = vld [vmem:[%s3 + $0x38] sm:$0xf]
    %v1016 = vld [vmem:[%s3 + $0x3c] sm:$0xff]
    %v1017 = vld [vmem:[%s3 + $0x44] sm:$0xf]
    %v1018 = vld [vmem:[%s3 + $0x48] sm:$0xff]
    %v1019 = vld [vmem:[%s3 + $0x50] sm:$0xf]
    %v1020 = vld [vmem:[%s3 + $0x54] sm:$0xff]
    %v1021 = vld [vmem:[%s3 + $0x5c] sm:$0xf]
    %v1022 = vld [vmem:[%s3 + $0x60] sm:$0xff]
    %v1023 = vld [vmem:[%s3 + $0x68] sm:$0xf]
    %v1024 = vld [vmem:[%s3 + $0x6c] sm:$0xff]
    %v1025 = vld [vmem:[%s3 + $0x74] sm:$0xf]
    %v1026 = vld [vmem:[%s3 + $0x78] sm:$0xff]
    %v1027 = vld [vmem:[%s3 + $0x80] sm:$0xf]
    %v1028 = vld [vmem:[%s3 + $0x84] sm:$0xff]
    %v1029 = vld [vmem:[%s3 + $0x8c] sm:$0xf]
    %v1030 = vld [vmem:[%s3 + $0x90] sm:$0xff]
    %v1031 = vld [vmem:[%s3 + $0x98] sm:$0xf]
    %v1032 = vld [vmem:[%s3 + $0x9c] sm:$0xff]
    %v1033 = vld [vmem:[%s3 + $0xa4] sm:$0xf]
    %v1034 = vld [vmem:[%s3 + $0xa8] sm:$0xff]
    %v1035 = vld [vmem:[%s3 + $0xb0] sm:$0xf]
    %v1036 = vld [vmem:[%s3 + $0xb4] sm:$0xff]
    %v1037 = vld [vmem:[%s3 + $0xbc] sm:$0xf]
    %v1038 = vld [vmem:[%s3 + $0xc0] sm:$0xff]
    %v1039 = vld [vmem:[%s3 + $0xc8] sm:$0xf]
    %v1040 = vld [vmem:[%s3 + $0xcc] sm:$0xff]
    %v1041 = vld [vmem:[%s3 + $0xd4] sm:$0xf]
    %v1042 = vld [vmem:[%s3 + $0xd8] sm:$0xff]
    %v1043 = vld [vmem:[%s3 + $0xe0] sm:$0xf]
    %v1044 = vld [vmem:[%s3 + $0xe4] sm:$0xff]
    %v1045 = vld [vmem:[%s3 + $0xec] sm:$0xf]
    %v1046 = vld [vmem:[%s3 + $0xf0] sm:$0xff]
    %v1047 = vld [vmem:[%s3 + $0xf8] sm:$0xf]
    %v1048 = vld [vmem:[%s3 + $0xfc] sm:$0xff]
    %v1049 = vld [vmem:[%s3 + $0x104] sm:$0xf]
    %v1050 = vld [vmem:[%s3 + $0x108] sm:$0xff]
    %v1051 = vld [vmem:[%s3 + $0x110] sm:$0xf]
    %v1052 = vld [vmem:[%s3 + $0x114] sm:$0xff]
    %v1053 = vld [vmem:[%s3 + $0x11c] sm:$0xf]
    %v1054 = vld [vmem:[%s3 + $0x120] sm:$0xff]
    %v1055 = vld [vmem:[%s3 + $0x128] sm:$0xf]
    %v1056 = vld [vmem:[%s3 + $0x12c] sm:$0xff]
    %v1057 = vld [vmem:[%s3 + $0x134] sm:$0xf]
    %v1058 = vld [vmem:[%s3 + $0x138] sm:$0xff]
    %v1059 = vld [vmem:[%s3 + $0x140] sm:$0xf]
    %v1060 = vld [vmem:[%s3 + $0x144] sm:$0xff]
    %v1061 = vld [vmem:[%s3 + $0x14c] sm:$0xf]
    %v1062 = vld [vmem:[%s3 + $0x150] sm:$0xff]
    %v1063 = vld [vmem:[%s3 + $0x158] sm:$0xf]
    %v1064 = vld [vmem:[%s3 + $0x15c] sm:$0xff]
    %v1065 = vld [vmem:[%s3 + $0x164] sm:$0xf]
    %v1066 = vld [vmem:[%s3 + $0x168] sm:$0xff]
    %v1067 = vld [vmem:[%s3 + $0x170] sm:$0xf]
    %v1068 = vld [vmem:[%s3 + $0x174] sm:$0xff]
    %v1069 = vld [vmem:[%s3 + $0x17c] sm:$0xf]
    %v1070 = vld [vmem:[%s3 + $0x180] sm:$0xff]
    %v1071 = vld [vmem:[%s3 + $0x188] sm:$0xf]
    %v1072 = vld [vmem:[%s3 + $0x18c] sm:$0xff]
    %v1073 = vld [vmem:[%s3 + $0x194] sm:$0xf]
    %v1074 = vld [vmem:[%s3 + $0x198] sm:$0xff]
    %v1075 = vld [vmem:[%s3 + $0x1a0] sm:$0xf]
    %v1076 = vld [vmem:[%s3 + $0x1a4] sm:$0xff]
    %v1077 = vld [vmem:[%s3 + $0x1ac] sm:$0xf]
    %v1078 = vld [vmem:[%s3 + $0x1b0] sm:$0xff]
    %v1079 = vld [vmem:[%s3 + $0x1b8] sm:$0xf]
    %v1080 = vld [vmem:[%s3 + $0x1bc] sm:$0xff]
    %v1081 = vld [vmem:[%s3 + $0x1c4] sm:$0xf]
    %v1082 = vld [vmem:[%s3 + $0x1c8] sm:$0xff]
    %v1083 = vld [vmem:[%s3 + $0x1d0] sm:$0xf]
    %v1084 = vld [vmem:[%s3 + $0x1d4] sm:$0xff]
    %v1085 = vld [vmem:[%s3 + $0x1dc] sm:$0xf]
    %v1086 = vld [vmem:[%s3 + $0x1e0] sm:$0xff]
    %v1087 = vld [vmem:[%s3 + $0x1e8] sm:$0xf]
    %v1088 = vld [vmem:[%s3 + $0x1ec] sm:$0xff]
    %v1089 = vld [vmem:[%s3 + $0x1f4] sm:$0xf]
    %v1090 = vld [vmem:[%s3 + $0x1f8] sm:$0xff]
    %v1091 = vld [vmem:[%s3 + $0x200] sm:$0xf]
    %v1092 = vld [vmem:[%s3 + $0x204] sm:$0xff]
    %v1093 = vld [vmem:[%s3 + $0x20c] sm:$0xf]
    %v1094 = vld [vmem:[%s3 + $0x210] sm:$0xff]
    %v1095 = vld [vmem:[%s3 + $0x218] sm:$0xf]
    %v1096 = vld [vmem:[%s3 + $0x21c] sm:$0xff]
    %v1097 = vld [vmem:[%s3 + $0x224] sm:$0xf]
    %v1098 = vld [vmem:[%s3 + $0x228] sm:$0xff]
    %v1099 = vld [vmem:[%s3 + $0x230] sm:$0xf]
    %v1100 = vld [vmem:[%s3 + $0x234] sm:$0xff]
    %v1101 = vld [vmem:[%s3 + $0x23c] sm:$0xf]
    %v1102 = vld [vmem:[%s3 + $0x240] sm:$0xff]
    %v1103 = vld [vmem:[%s3 + $0x248] sm:$0xf]
    %v1104 = vld [vmem:[%s3 + $0x24c] sm:$0xff]
    %v1105 = vld [vmem:[%s3 + $0x254] sm:$0xf]
    %v1106 = vld [vmem:[%s3 + $0x258] sm:$0xff]
    %v1107 = vld [vmem:[%s3 + $0x260] sm:$0xf]
    %v1108 = vld [vmem:[%s3 + $0x264] sm:$0xff]
    %v1109 = vld [vmem:[%s3 + $0x26c] sm:$0xf]
    %v1110 = vld [vmem:[%s3 + $0x270] sm:$0xff]
    %v1111 = vld [vmem:[%s3 + $0x278] sm:$0xf]
    %v1112 = vld [vmem:[%s3 + $0x27c] sm:$0xff]
    %v1113 = vld [vmem:[%s3 + $0x284] sm:$0xf]
    %v1114 = vld [vmem:[%s3 + $0x288] sm:$0xff]
    %v1115 = vld [vmem:[%s3 + $0x290] sm:$0xf]
    %v1116 = vld [vmem:[%s3 + $0x294] sm:$0xff]
    %v1117 = vld [vmem:[%s3 + $0x29c] sm:$0xf]
    %v1118 = vld [vmem:[%s3 + $0x2a0] sm:$0xff]
    %v1119 = vld [vmem:[%s3 + $0x2a8] sm:$0xf]
    %v1120 = vld [vmem:[%s3 + $0x2ac] sm:$0xff]
    %v1121 = vld [vmem:[%s3 + $0x2b4] sm:$0xf]
    %v1122 = vld [vmem:[%s3 + $0x2b8] sm:$0xff]
    %v1123 = vld [vmem:[%s3 + $0x2c0] sm:$0xf]
    %v1124 = vld [vmem:[%s3 + $0x2c4] sm:$0xff]
    %v1125 = vld [vmem:[%s3 + $0x2cc] sm:$0xf]
    %v1126 = vld [vmem:[%s3 + $0x2d0] sm:$0xff]
    %v1127 = vld [vmem:[%s3 + $0x2d8] sm:$0xf]
    %v1128 = vld [vmem:[%s3 + $0x2dc] sm:$0xff]
    %v1129 = vld [vmem:[%s3 + $0x2e4] sm:$0xf]
    %v1130 = vld [vmem:[%s3 + $0x2e8] sm:$0xff]
    %v1131 = vld [vmem:[%s3 + $0x2f0] sm:$0xf]
    %v1132 = vld [vmem:[%s3 + $0x2f4] sm:$0xff]
    %v1133 = vld [vmem:[%s3 + $0x2fc] sm:$0xf]
    %v1134 = vld [vmem:[%s4] sm:$0x7]
    %v1136 = vlaneseq
    %v1137 = vshrl.u32 %v1136, 7
    %v1138 = vsub.s32 0, %v1137
    %v1139 = vrot.slane %v1134, %v1138
    %v1140 = vlaneseq
    %v1141 = vshrl.u32 %v1140, 7
    %v1142 = vsub.s32 1, %v1141
    %v1143 = vrot.slane %v1134, %v1142
    %v1144 = vlaneseq
    %v1145 = vshrl.u32 %v1144, 7
    %v1146 = vsub.s32 2, %v1145
    %v1147 = vrot.slane %v1134, %v1146
    %v1279 = vunpack.c.l.b16 %v1006
    %v1280 = vunpack.c.h.b16 %v1006
    %v1281 = vunpack.c.l.b16 %v1007
    %v1282 = vunpack.c.l.b16 %v1008
    %v1283 = vunpack.c.h.b16 %v1008
    %v1284 = vunpack.c.l.b16 %v1009
    %v1285 = vunpack.c.l.b16 %v1010
    %v1286 = vunpack.c.h.b16 %v1010
    %v1287 = vunpack.c.l.b16 %v1011
    %v1288 = vunpack.c.l.b16 %v1012
    %v1289 = vunpack.c.h.b16 %v1012
    %v1290 = vunpack.c.l.b16 %v1013
    %v1291 = vunpack.c.l.b16 %v1014
    %v1292 = vunpack.c.h.b16 %v1014
    %v1293 = vunpack.c.l.b16 %v1015
    %v1294 = vunpack.c.l.b16 %v1016
    %v1295 = vunpack.c.h.b16 %v1016
    %v1296 = vunpack.c.l.b16 %v1017
    %v1297 = vunpack.c.l.b16 %v1018
    %v1298 = vunpack.c.h.b16 %v1018
    %v1299 = vunpack.c.l.b16 %v1019
    %v1300 = vunpack.c.l.b16 %v1020
    %v1301 = vunpack.c.h.b16 %v1020
    %v1302 = vunpack.c.l.b16 %v1021
    %v1303 = vunpack.c.l.b16 %v1022
    %v1304 = vunpack.c.h.b16 %v1022
    %v1305 = vunpack.c.l.b16 %v1023
    %v1306 = vunpack.c.l.b16 %v1024
    %v1307 = vunpack.c.h.b16 %v1024
    %v1308 = vunpack.c.l.b16 %v1025
    %v1309 = vunpack.c.l.b16 %v1026
    %v1310 = vunpack.c.h.b16 %v1026
    %v1311 = vunpack.c.l.b16 %v1027
    %v1312 = vunpack.c.l.b16 %v1028
    %v1313 = vunpack.c.h.b16 %v1028
    %v1314 = vunpack.c.l.b16 %v1029
    %v1315 = vunpack.c.l.b16 %v1030
    %v1316 = vunpack.c.h.b16 %v1030
    %v1317 = vunpack.c.l.b16 %v1031
    %v1318 = vunpack.c.l.b16 %v1032
    %v1319 = vunpack.c.h.b16 %v1032
    %v1320 = vunpack.c.l.b16 %v1033
    %v1321 = vunpack.c.l.b16 %v1034
    %v1322 = vunpack.c.h.b16 %v1034
    %v1323 = vunpack.c.l.b16 %v1035
    %v1324 = vunpack.c.l.b16 %v1036
    %v1325 = vunpack.c.h.b16 %v1036
    %v1326 = vunpack.c.l.b16 %v1037
    %v1327 = vunpack.c.l.b16 %v1038
    %v1328 = vunpack.c.h.b16 %v1038
    %v1329 = vunpack.c.l.b16 %v1039
    %v1330 = vunpack.c.l.b16 %v1040
    %v1331 = vunpack.c.h.b16 %v1040
    %v1332 = vunpack.c.l.b16 %v1041
    %v1333 = vunpack.c.l.b16 %v1042
    %v1334 = vunpack.c.h.b16 %v1042
    %v1335 = vunpack.c.l.b16 %v1043
    %v1336 = vunpack.c.l.b16 %v1044
    %v1337 = vunpack.c.h.b16 %v1044
    %v1338 = vunpack.c.l.b16 %v1045
    %v1339 = vunpack.c.l.b16 %v1046
    %v1340 = vunpack.c.h.b16 %v1046
    %v1341 = vunpack.c.l.b16 %v1047
    %v1342 = vunpack.c.l.b16 %v1048
    %v1343 = vunpack.c.h.b16 %v1048
    %v1344 = vunpack.c.l.b16 %v1049
    %v1345 = vunpack.c.l.b16 %v1050
    %v1346 = vunpack.c.h.b16 %v1050
    %v1347 = vunpack.c.l.b16 %v1051
    %v1348 = vunpack.c.l.b16 %v1052
    %v1349 = vunpack.c.h.b16 %v1052
    %v1350 = vunpack.c.l.b16 %v1053
    %v1351 = vunpack.c.l.b16 %v1054
    %v1352 = vunpack.c.h.b16 %v1054
    %v1353 = vunpack.c.l.b16 %v1055
    %v1354 = vunpack.c.l.b16 %v1056
    %v1355 = vunpack.c.h.b16 %v1056
    %v1356 = vunpack.c.l.b16 %v1057
    %v1357 = vunpack.c.l.b16 %v1058
    %v1358 = vunpack.c.h.b16 %v1058
    %v1359 = vunpack.c.l.b16 %v1059
    %v1360 = vunpack.c.l.b16 %v1060
    %v1361 = vunpack.c.h.b16 %v1060
    %v1362 = vunpack.c.l.b16 %v1061
    %v1363 = vunpack.c.l.b16 %v1062
    %v1364 = vunpack.c.h.b16 %v1062
    %v1365 = vunpack.c.l.b16 %v1063
    %v1366 = vunpack.c.l.b16 %v1064
    %v1367 = vunpack.c.h.b16 %v1064
    %v1368 = vunpack.c.l.b16 %v1065
    %v1369 = vunpack.c.l.b16 %v1066
    %v1370 = vunpack.c.h.b16 %v1066
    %v1371 = vunpack.c.l.b16 %v1067
    %v1372 = vunpack.c.l.b16 %v1068
    %v1373 = vunpack.c.h.b16 %v1068
    %v1374 = vunpack.c.l.b16 %v1069
    %v1375 = vunpack.c.l.b16 %v1070
    %v1376 = vunpack.c.h.b16 %v1070
    %v1377 = vunpack.c.l.b16 %v1071
    %v1378 = vunpack.c.l.b16 %v1072
    %v1379 = vunpack.c.h.b16 %v1072
    %v1380 = vunpack.c.l.b16 %v1073
    %v1381 = vunpack.c.l.b16 %v1074
    %v1382 = vunpack.c.h.b16 %v1074
    %v1383 = vunpack.c.l.b16 %v1075
    %v1384 = vunpack.c.l.b16 %v1076
    %v1385 = vunpack.c.h.b16 %v1076
    %v1386 = vunpack.c.l.b16 %v1077
    %v1387 = vunpack.c.l.b16 %v1078
    %v1388 = vunpack.c.h.b16 %v1078
    %v1389 = vunpack.c.l.b16 %v1079
    %v1390 = vunpack.c.l.b16 %v1080
    %v1391 = vunpack.c.h.b16 %v1080
    %v1392 = vunpack.c.l.b16 %v1081
    %v1393 = vunpack.c.l.b16 %v1082
    %v1394 = vunpack.c.h.b16 %v1082
    %v1395 = vunpack.c.l.b16 %v1083
    %v1396 = vunpack.c.l.b16 %v1084
    %v1397 = vunpack.c.h.b16 %v1084
    %v1398 = vunpack.c.l.b16 %v1085
    %v1399 = vunpack.c.l.b16 %v1086
    %v1400 = vunpack.c.h.b16 %v1086
    %v1401 = vunpack.c.l.b16 %v1087
    %v1402 = vunpack.c.l.b16 %v1088
    %v1403 = vunpack.c.h.b16 %v1088
    %v1404 = vunpack.c.l.b16 %v1089
    %v1405 = vunpack.c.l.b16 %v1090
    %v1406 = vunpack.c.h.b16 %v1090
    %v1407 = vunpack.c.l.b16 %v1091
    %v1408 = vunpack.c.l.b16 %v1092
    %v1409 = vunpack.c.h.b16 %v1092
    %v1410 = vunpack.c.l.b16 %v1093
    %v1411 = vunpack.c.l.b16 %v1094
    %v1412 = vunpack.c.h.b16 %v1094
    %v1413 = vunpack.c.l.b16 %v1095
    %v1414 = vunpack.c.l.b16 %v1096
    %v1415 = vunpack.c.h.b16 %v1096
    %v1416 = vunpack.c.l.b16 %v1097
    %v1417 = vunpack.c.l.b16 %v1098
    %v1418 = vunpack.c.h.b16 %v1098
    %v1419 = vunpack.c.l.b16 %v1099
    %v1420 = vunpack.c.l.b16 %v1100
    %v1421 = vunpack.c.h.b16 %v1100
    %v1422 = vunpack.c.l.b16 %v1101
    %v1423 = vunpack.c.l.b16 %v1102
    %v1424 = vunpack.c.h.b16 %v1102
    %v1425 = vunpack.c.l.b16 %v1103
    %v1426 = vunpack.c.l.b16 %v1104
    %v1427 = vunpack.c.h.b16 %v1104
    %v1428 = vunpack.c.l.b16 %v1105
    %v1429 = vunpack.c.l.b16 %v1106
    %v1430 = vunpack.c.h.b16 %v1106
    %v1431 = vunpack.c.l.b16 %v1107
    %v1432 = vunpack.c.l.b16 %v1108
    %v1433 = vunpack.c.h.b16 %v1108
    %v1434 = vunpack.c.l.b16 %v1109
    %v1435 = vunpack.c.l.b16 %v1110
    %v1436 = vunpack.c.h.b16 %v1110
    %v1437 = vunpack.c.l.b16 %v1111
    %v1438 = vunpack.c.l.b16 %v1112
    %v1439 = vunpack.c.h.b16 %v1112
    %v1440 = vunpack.c.l.b16 %v1113
    %v1441 = vunpack.c.l.b16 %v1114
    %v1442 = vunpack.c.h.b16 %v1114
    %v1443 = vunpack.c.l.b16 %v1115
    %v1444 = vunpack.c.l.b16 %v1116
    %v1445 = vunpack.c.h.b16 %v1116
    %v1446 = vunpack.c.l.b16 %v1117
    %v1447 = vunpack.c.l.b16 %v1118
    %v1448 = vunpack.c.h.b16 %v1118
    %v1449 = vunpack.c.l.b16 %v1119
    %v1450 = vunpack.c.l.b16 %v1120
    %v1451 = vunpack.c.h.b16 %v1120
    %v1452 = vunpack.c.l.b16 %v1121
    %v1453 = vunpack.c.l.b16 %v1122
    %v1454 = vunpack.c.h.b16 %v1122
    %v1455 = vunpack.c.l.b16 %v1123
    %v1456 = vunpack.c.l.b16 %v1124
    %v1457 = vunpack.c.h.b16 %v1124
    %v1458 = vunpack.c.l.b16 %v1125
    %v1459 = vunpack.c.l.b16 %v1126
    %v1460 = vunpack.c.h.b16 %v1126
    %v1461 = vunpack.c.l.b16 %v1127
    %v1462 = vunpack.c.l.b16 %v1128
    %v1463 = vunpack.c.h.b16 %v1128
    %v1464 = vunpack.c.l.b16 %v1129
    %v1465 = vunpack.c.l.b16 %v1130
    %v1466 = vunpack.c.h.b16 %v1130
    %v1467 = vunpack.c.l.b16 %v1131
    %v1468 = vunpack.c.l.b16 %v1132
    %v1469 = vunpack.c.h.b16 %v1132
    %v1470 = vunpack.c.l.b16 %v1133
    %v1471 = vpack.c.b16 %v1282, %v1279
    %v1472 = vpack.c.b16 %v1283, %v1280
    %v1473 = vpack.c.b16 %v1284, %v1281
    %v1474 = vpack.c.b16 %v1288, %v1285
    %v1475 = vpack.c.b16 %v1289, %v1286
    %v1476 = vpack.c.b16 %v1290, %v1287
    %v1477 = vpack.c.b16 %v1294, %v1291
    %v1478 = vpack.c.b16 %v1295, %v1292
    %v1479 = vpack.c.b16 %v1296, %v1293
    %v1480 = vpack.c.b16 %v1300, %v1297
    %v1481 = vpack.c.b16 %v1301, %v1298
    %v1482 = vpack.c.b16 %v1302, %v1299
    %v1483 = vpack.c.b16 %v1306, %v1303
    %v1484 = vpack.c.b16 %v1307, %v1304
    %v1485 = vpack.c.b16 %v1308, %v1305
    %v1486 = vpack.c.b16 %v1312, %v1309
    %v1487 = vpack.c.b16 %v1313, %v1310
    %v1488 = vpack.c.b16 %v1314, %v1311
    %v1489 = vpack.c.b16 %v1318, %v1315
    %v1490 = vpack.c.b16 %v1319, %v1316
    %v1491 = vpack.c.b16 %v1320, %v1317
    %v1492 = vpack.c.b16 %v1324, %v1321
    %v1493 = vpack.c.b16 %v1325, %v1322
    %v1494 = vpack.c.b16 %v1326, %v1323
    %v1495 = vpack.c.b16 %v1330, %v1327
    %v1496 = vpack.c.b16 %v1331, %v1328
    %v1497 = vpack.c.b16 %v1332, %v1329
    %v1498 = vpack.c.b16 %v1336, %v1333
    %v1499 = vpack.c.b16 %v1337, %v1334
    %v1500 = vpack.c.b16 %v1338, %v1335
    %v1501 = vpack.c.b16 %v1342, %v1339
    %v1502 = vpack.c.b16 %v1343, %v1340
    %v1503 = vpack.c.b16 %v1344, %v1341
    %v1504 = vpack.c.b16 %v1348, %v1345
    %v1505 = vpack.c.b16 %v1349, %v1346
    %v1506 = vpack.c.b16 %v1350, %v1347
    %v1507 = vpack.c.b16 %v1354, %v1351
    %v1508 = vpack.c.b16 %v1355, %v1352
    %v1509 = vpack.c.b16 %v1356, %v1353
    %v1510 = vpack.c.b16 %v1360, %v1357
    %v1511 = vpack.c.b16 %v1361, %v1358
    %v1512 = vpack.c.b16 %v1362, %v1359
    %v1513 = vpack.c.b16 %v1366, %v1363
    %v1514 = vpack.c.b16 %v1367, %v1364
    %v1515 = vpack.c.b16 %v1368, %v1365
    %v1516 = vpack.c.b16 %v1372, %v1369
    %v1517 = vpack.c.b16 %v1373, %v1370
    %v1518 = vpack.c.b16 %v1374, %v1371
    %v1519 = vpack.c.b16 %v1378, %v1375
    %v1520 = vpack.c.b16 %v1379, %v1376
    %v1521 = vpack.c.b16 %v1380, %v1377
    %v1522 = vpack.c.b16 %v1384, %v1381
    %v1523 = vpack.c.b16 %v1385, %v1382
    %v1524 = vpack.c.b16 %v1386, %v1383
    %v1525 = vpack.c.b16 %v1390, %v1387
    %v1526 = vpack.c.b16 %v1391, %v1388
    %v1527 = vpack.c.b16 %v1392, %v1389
    %v1528 = vpack.c.b16 %v1396, %v1393
    %v1529 = vpack.c.b16 %v1397, %v1394
    %v1530 = vpack.c.b16 %v1398, %v1395
    %v1531 = vpack.c.b16 %v1402, %v1399
    %v1532 = vpack.c.b16 %v1403, %v1400
    %v1533 = vpack.c.b16 %v1404, %v1401
    %v1534 = vpack.c.b16 %v1408, %v1405
    %v1535 = vpack.c.b16 %v1409, %v1406
    %v1536 = vpack.c.b16 %v1410, %v1407
    %v1537 = vpack.c.b16 %v1414, %v1411
    %v1538 = vpack.c.b16 %v1415, %v1412
    %v1539 = vpack.c.b16 %v1416, %v1413
    %v1540 = vpack.c.b16 %v1420, %v1417
    %v1541 = vpack.c.b16 %v1421, %v1418
    %v1542 = vpack.c.b16 %v1422, %v1419
    %v1543 = vpack.c.b16 %v1426, %v1423
    %v1544 = vpack.c.b16 %v1427, %v1424
    %v1545 = vpack.c.b16 %v1428, %v1425
    %v1546 = vpack.c.b16 %v1432, %v1429
    %v1547 = vpack.c.b16 %v1433, %v1430
    %v1548 = vpack.c.b16 %v1434, %v1431
    %v1549 = vpack.c.b16 %v1438, %v1435
    %v1550 = vpack.c.b16 %v1439, %v1436
    %v1551 = vpack.c.b16 %v1440, %v1437
    %v1552 = vpack.c.b16 %v1444, %v1441
    %v1553 = vpack.c.b16 %v1445, %v1442
    %v1554 = vpack.c.b16 %v1446, %v1443
    %v1555 = vpack.c.b16 %v1450, %v1447
    %v1556 = vpack.c.b16 %v1451, %v1448
    %v1557 = vpack.c.b16 %v1452, %v1449
    %v1558 = vpack.c.b16 %v1456, %v1453
    %v1559 = vpack.c.b16 %v1457, %v1454
    %v1560 = vpack.c.b16 %v1458, %v1455
    %v1561 = vpack.c.b16 %v1462, %v1459
    %v1562 = vpack.c.b16 %v1463, %v1460
    %v1563 = vpack.c.b16 %v1464, %v1461
    %v1564 = vpack.c.b16 %v1468, %v1465
    %v1565 = vpack.c.b16 %v1469, %v1466
    %v1566 = vpack.c.b16 %v1470, %v1467
    %1663 = vmatprep.subr.bf16.mxu0 %v1472
    %1664 = vmatpush1.bf16.msra.mxu0 %v1471
    %1665 = vmatprep.subr.bf16.mxu0 %v1475
    %1666 = vmatpush1.bf16.msra.mxu0 %v1474
    %1667 = vmatprep.subr.bf16.mxu0 %v1478
    %1668 = vmatpush1.bf16.msra.mxu0 %v1477
    %1669 = vmatprep.subr.bf16.mxu0 %v1481
    %1670 = vmatpush1.bf16.msra.mxu0 %v1480
    %1671 = vmatprep.subr.bf16.mxu0 %v1484
    %1672 = vmatpush1.bf16.msra.mxu0 %v1483
    %1673 = vmatprep.subr.bf16.mxu0 %v1487
    %1674 = vmatpush1.bf16.msra.mxu0 %v1486
    %1675 = vmatprep.subr.bf16.mxu0 %v1490
    %1676 = vmatpush1.bf16.msra.mxu0 %v1489
    %1677 = vmatprep.subr.bf16.mxu0 %v1493
    %1678 = vmatpush1.bf16.msra.mxu0 %v1492
    %1679 = vmatprep.subr.bf16.mxu0 %v1496
    %1680 = vmatpush1.bf16.msra.mxu0 %v1495
    %1681 = vmatprep.subr.bf16.mxu0 %v1499
    %1682 = vmatpush1.bf16.msra.mxu0 %v1498
    %1683 = vmatprep.subr.bf16.mxu0 %v1502
    %1684 = vmatpush1.bf16.msra.mxu0 %v1501
    %1685 = vmatprep.subr.bf16.mxu0 %v1505
    %1686 = vmatpush1.bf16.msra.mxu0 %v1504
    %1687 = vmatprep.subr.bf16.mxu0 %v1508
    %1688 = vmatpush1.bf16.msra.mxu0 %v1507
    %1689 = vmatprep.subr.bf16.mxu0 %v1511
    %1690 = vmatpush1.bf16.msra.mxu0 %v1510
    %1691 = vmatprep.subr.bf16.mxu0 %v1514
    %1692 = vmatpush1.bf16.msra.mxu0 %v1513
    %1693 = vmatprep.subr.bf16.mxu0 %v1517
    %1694 = vmatpush1.bf16.msra.mxu0 %v1516
    %1695 = vmatprep.mubr.bf16.mxu0 %v1003
    %1696 = vmatmul.mubr.bf16.gmra.mrb[0].mxu0 %v1002
    %v1697 = vpop.f32.mrb[0].mxu0
    %v1698 = vadd.f32 %v1139, %v1697
    %v1699 = vpop.f32.mrb[0].mxu0
    %v1700 = vadd.f32 %v1143, %v1699
    %v1701 = vpop.f32.mrb[0].mxu0
    %v1702 = vadd.f32 %v1139, %v1701
    %v1703 = vpop.f32.mrb[0].mxu0
    %v1704 = vadd.f32 %v1143, %v1703
    %1705 = vdwg.mxu0
    %1706 = vmatprep.subr.bf16.mxu0 %v1520
    %1707 = vmatpush1.bf16.msra.mxu0 %v1519
    %1708 = vmatprep.subr.bf16.mxu0 %v1523
    %1709 = vmatpush1.bf16.msra.mxu0 %v1522
    %1710 = vmatprep.subr.bf16.mxu0 %v1526
    %1711 = vmatpush1.bf16.msra.mxu0 %v1525
    %1712 = vmatprep.subr.bf16.mxu0 %v1529
    %1713 = vmatpush1.bf16.msra.mxu0 %v1528
    %1714 = vmatprep.subr.bf16.mxu0 %v1532
    %1715 = vmatpush1.bf16.msra.mxu0 %v1531
    %1716 = vmatprep.subr.bf16.mxu0 %v1535
    %1717 = vmatpush1.bf16.msra.mxu0 %v1534
    %1718 = vmatprep.subr.bf16.mxu0 %v1538
    %1719 = vmatpush1.bf16.msra.mxu0 %v1537
    %1720 = vmatprep.subr.bf16.mxu0 %v1541
    %1721 = vmatpush1.bf16.msra.mxu0 %v1540
    %1722 = vmatprep.subr.bf16.mxu0 %v1544
    %1723 = vmatpush1.bf16.msra.mxu0 %v1543
    %1724 = vmatprep.subr.bf16.mxu0 %v1547
    %1725 = vmatpush1.bf16.msra.mxu0 %v1546
    %1726 = vmatprep.subr.bf16.mxu0 %v1550
    %1727 = vmatpush1.bf16.msra.mxu0 %v1549
    %1728 = vmatprep.subr.bf16.mxu0 %v1553
    %1729 = vmatpush1.bf16.msra.mxu0 %v1552
    %1730 = vmatprep.subr.bf16.mxu0 %v1556
    %1731 = vmatpush1.bf16.msra.mxu0 %v1555
    %1732 = vmatprep.subr.bf16.mxu0 %v1559
    %1733 = vmatpush1.bf16.msra.mxu0 %v1558
    %1734 = vmatprep.subr.bf16.mxu0 %v1562
    %1735 = vmatpush1.bf16.msra.mxu0 %v1561
    %1736 = vmatprep.subr.bf16.mxu0 %v1565
    %1737 = vmatpush1.bf16.msra.mxu0 %v1564
    %1738 = vmatprep.mubr.bf16.mxu0 %v1005
    %1739 = vmatmul.mubr.bf16.gmra.mrb[0].mxu0 %v1004
    %v1740 = vpop.f32.mrb[0].mxu0
    %v1741 = vadd.f32 %v1698, %v1740
    %v1742 = vpop.f32.mrb[0].mxu0
    %v1743 = vadd.f32 %v1700, %v1742
    %v1744 = vpop.f32.mrb[0].mxu0
    %v1745 = vadd.f32 %v1702, %v1744
    %v1746 = vpop.f32.mrb[0].mxu0
    %v1747 = vadd.f32 %v1704, %v1746
    %1748 = vdwg.mxu0
    %1749 = vmatprep.subr.bf16.mxu0 0
    %1750 = vmatpush1.bf16.msra.mxu0 %v1473
    %1751 = vmatprep.subr.bf16.mxu0 0
    %1752 = vmatpush1.bf16.msra.mxu0 %v1476
    %1753 = vmatprep.subr.bf16.mxu0 0
    %1754 = vmatpush1.bf16.msra.mxu0 %v1479
    %1755 = vmatprep.subr.bf16.mxu0 0
    %1756 = vmatpush1.bf16.msra.mxu0 %v1482
    %1757 = vmatprep.subr.bf16.mxu0 0
    %1758 = vmatpush1.bf16.msra.mxu0 %v1485
    %1759 = vmatprep.subr.bf16.mxu0 0
    %1760 = vmatpush1.bf16.msra.mxu0 %v1488
    %1761 = vmatprep.subr.bf16.mxu0 0
    %1762 = vmatpush1.bf16.msra.mxu0 %v1491
    %1763 = vmatprep.subr.bf16.mxu0 0
    %1764 = vmatpush1.bf16.msra.mxu0 %v1494
    %1765 = vmatprep.subr.bf16.mxu0 0
    %1766 = vmatpush1.bf16.msra.mxu0 %v1497
    %1767 = vmatprep.subr.bf16.mxu0 0
    %1768 = vmatpush1.bf16.msra.mxu0 %v1500
    %1769 = vmatprep.subr.bf16.mxu0 0
    %1770 = vmatpush1.bf16.msra.mxu0 %v1503
    %1771 = vmatprep.subr.bf16.mxu0 0
    %1772 = vmatpush1.bf16.msra.mxu0 %v1506
    %1773 = vmatprep.subr.bf16.mxu0 0
    %1774 = vmatpush1.bf16.msra.mxu0 %v1509
    %1775 = vmatprep.subr.bf16.mxu0 0
    %1776 = vmatpush1.bf16.msra.mxu0 %v1512
    %1777 = vmatprep.subr.bf16.mxu0 0
    %1778 = vmatpush1.bf16.msra.mxu0 %v1515
    %1779 = vmatprep.subr.bf16.mxu0 0
    %1780 = vmatpush1.bf16.msra.mxu0 %v1518
    %1781 = vmatprep.mubr.bf16.mxu0 %v1003
    %1782 = vmatmul.mubr.bf16.gmra.mrb[0].mxu0 %v1002
    %v1783 = vpop.f32.mrb[0].mxu0
    %v1784 = vadd.f32 %v1147, %v1783
    %v1785 = vpop.f32.mrb[0].mxu0
    %v1786 = vpop.f32.mrb[0].mxu0
    %v1787 = vadd.f32 %v1147, %v1786
    %v1788 = vpop.f32.mrb[0].mxu0
    %1789 = vdwg.mxu0
    %1790 = vmatprep.subr.bf16.mxu0 0
    %1791 = vmatpush1.bf16.msra.mxu0 %v1521
    %1792 = vmatprep.subr.bf16.mxu0 0
    %1793 = vmatpush1.bf16.msra.mxu0 %v1524
    %1794 = vmatprep.subr.bf16.mxu0 0
    %1795 = vmatpush1.bf16.msra.mxu0 %v1527
    %1796 = vmatprep.subr.bf16.mxu0 0
    %1797 = vmatpush1.bf16.msra.mxu0 %v1530
    %1798 = vmatprep.subr.bf16.mxu0 0
    %1799 = vmatpush1.bf16.msra.mxu0 %v1533
    %1800 = vmatprep.subr.bf16.mxu0 0
    %1801 = vmatpush1.bf16.msra.mxu0 %v1536
    %1802 = vmatprep.subr.bf16.mxu0 0
    %1803 = vmatpush1.bf16.msra.mxu0 %v1539
    %1804 = vmatprep.subr.bf16.mxu0 0
    %1805 = vmatpush1.bf16.msra.mxu0 %v1542
    %1806 = vmatprep.subr.bf16.mxu0 0
    %1807 = vmatpush1.bf16.msra.mxu0 %v1545
    %1808 = vmatprep.subr.bf16.mxu0 0
    %1809 = vmatpush1.bf16.msra.mxu0 %v1548
    %1810 = vmatprep.subr.bf16.mxu0 0
    %1811 = vmatpush1.bf16.msra.mxu0 %v1551
    %1812 = vmatprep.subr.bf16.mxu0 0
    %1813 = vmatpush1.bf16.msra.mxu0 %v1554
    %1814 = vmatprep.subr.bf16.mxu0 0
    %1815 = vmatpush1.bf16.msra.mxu0 %v1557
    %1816 = vmatprep.subr.bf16.mxu0 0
    %1817 = vmatpush1.bf16.msra.mxu0 %v1560
    %1818 = vmatprep.subr.bf16.mxu0 0
    %1819 = vmatpush1.bf16.msra.mxu0 %v1563
    %1820 = vmatprep.subr.bf16.mxu0 0
    %1821 = vmatpush1.bf16.msra.mxu0 %v1566
    %1822 = vmatprep.mubr.bf16.mxu0 %v1005
    %1823 = vmatmul.mubr.bf16.gmra.mrb[0].mxu0 %v1004
    %v1824 = vpop.f32.mrb[0].mxu0
    %v1825 = vadd.f32 %v1784, %v1824
    %v1826 = vpop.f32.mrb[0].mxu0
    %v1827 = vpop.f32.mrb[0].mxu0
    %v1828 = vadd.f32 %v1787, %v1827
    %v1829 = vpop.f32.mrb[0].mxu0
    %1830 = vdwg.mxu0
    %v1831 = vadd.f32 %v1741, %v1743
    %vm1832 = vcmask 359424
    %v1833 = vsel %vm1832, %v1825, 0.0
    %v1834 = vadd.f32 %v1831, %v1833
    %1835 = vadd.xlane.f32.xlu0 %v1834
    %v1836 = vpop.xlane.xlu0 %1835
    %v1837 = vadd.f32 %v1745, %v1747
    %v1838 = vsel %vm1832, %v1828, 0.0
    %v1839 = vadd.f32 %v1837, %v1838
    %1840 = vadd.xlane.f32.xlu0 %v1839
    %v1841 = vpop.xlane.xlu0 %1840
    %v1842 = vrcp.pop 300.0
    %v1843 = vmul.f32 %v1836, %v1842
    %v1844 = vmul.f32 %v1841, %v1842
    %v1845 = vsub.f32 %v1741, %v1843
    %v1846 = vsub.f32 %v1743, %v1843
    %v1847 = vsub.f32 %v1825, %v1843
    %v1848 = vsub.f32 %v1745, %v1844
    %v1849 = vsub.f32 %v1747, %v1844
    %v1850 = vsub.f32 %v1828, %v1844
    %v1851 = vmul.f32 %v1845, %v1845
    %v1852 = vmul.f32 %v1846, %v1846
    %v1853 = vmul.f32 %v1847, %v1847
    %v1854 = vmul.f32 %v1848, %v1848
    %v1855 = vmul.f32 %v1849, %v1849
    %v1856 = vmul.f32 %v1850, %v1850
    %v1857 = vadd.f32 %v1851, %v1852
    %v1858 = vsel %vm1832, %v1853, 0.0
    %v1859 = vadd.f32 %v1857, %v1858
    %1860 = vadd.xlane.f32.xlu0 %v1859
    %v1861 = vpop.xlane.xlu0 %1860
    %v1862 = vadd.f32 %v1854, %v1855
    %v1863 = vsel %vm1832, %v1856, 0.0
    %v1864 = vadd.f32 %v1862, %v1863
    %1865 = vadd.xlane.f32.xlu0 %v1864
    %v1866 = vpop.xlane.xlu0 %1865
    %v1867 = vmul.f32 %v1861, %v1842
    %v1868 = vmul.f32 %v1866, %v1842
    %v1869 = vadd.f32 %v1867, 1e-05
    %v1870 = vadd.f32 %v1868, 1e-05
    %v1871 = vrsqrt.pop %v1869
    %v1872 = vrsqrt.pop %v1870
    %v1873 = vld [vmem:[%s5] sm:$0x7]
    %v1875 = vlaneseq
    %v1876 = vshrl.u32 %v1875, 7
    %v1877 = vsub.s32 0, %v1876
    %v1878 = vrot.slane %v1873, %v1877
    %v1879 = vlaneseq
    %v1880 = vshrl.u32 %v1879, 7
    %v1881 = vsub.s32 1, %v1880
    %v1882 = vrot.slane %v1873, %v1881
    %v1883 = vlaneseq
    %v1884 = vshrl.u32 %v1883, 7
    %v1885 = vsub.s32 2, %v1884
    %v1886 = vrot.slane %v1873, %v1885
    %v1890 = vmul.f32 %v1871, %v1878
    %v1891 = vmul.f32 %v1871, %v1882
    %v1892 = vmul.f32 %v1871, %v1886
    %v1893 = vmul.f32 %v1872, %v1878
    %v1894 = vmul.f32 %v1872, %v1882
    %v1895 = vmul.f32 %v1872, %v1886
    %v1896 = vmul.f32 %v1845, %v1890
    %v1897 = vmul.f32 %v1846, %v1891
    %v1898 = vmul.f32 %v1847, %v1892
    %v1899 = vmul.f32 %v1848, %v1893
    %v1900 = vmul.f32 %v1849, %v1894
    %v1901 = vmul.f32 %v1850, %v1895
    %v1902 = vld [vmem:[%s6] sm:$0x7]
    %v1904 = vlaneseq
    %v1905 = vshrl.u32 %v1904, 7
    %v1906 = vsub.s32 0, %v1905
    %v1907 = vrot.slane %v1902, %v1906
    %v1908 = vlaneseq
    %v1909 = vshrl.u32 %v1908, 7
    %v1910 = vsub.s32 1, %v1909
    %v1911 = vrot.slane %v1902, %v1910
    %v1912 = vlaneseq
    %v1913 = vshrl.u32 %v1912, 7
    %v1914 = vsub.s32 2, %v1913
    %v1915 = vrot.slane %v1902, %v1914
    %v1919 = vadd.f32 %v1896, %v1907
    %v1920 = vadd.f32 %v1897, %v1911
    %v1921 = vadd.f32 %v1898, %v1915
    %v1922 = vadd.f32 %v1899, %v1907
    %v1923 = vadd.f32 %v1900, %v1911
    %v1924 = vadd.f32 %v1901, %v1915
    %1925 = vst [vmem:[#allocation2] sm:$0xff] %v1919
    %1926 = vst [vmem:[#allocation2 + $0x8] sm:$0xff] %v1920
    %1927 = vst.msk [vmem:[#allocation2 + $0x10] sm:$0xff] %vm1832, %v1921
    %1928 = vst [vmem:[#allocation2 + $0x18] sm:$0xff] %v1922
    %1929 = vst [vmem:[#allocation2 + $0x20] sm:$0xff] %v1923
    %1930 = vst.msk [vmem:[#allocation2 + $0x28] sm:$0xff] %vm1832, %v1924
    // Predicated region
    $region30: #{tpu_custom_call.1} parent=1 // pred_check
      _
    $region31: #{tpu_custom_call.1} parent=1 // pred_check_branch
      %1932 = sbr.rel (0) target = $region33
    $region32: #{tpu_custom_call.1} parent=1 // pred_region
      %s1934 = ssub.s32 768, 384
      %1935 = vsyncadd [#allocation3], %s1934
      %s1936 = sshll.u32 [#allocation2], 4
      %s1937 = int_to_ptr.vmem [resolvable:$true] %s1936
      %1942 = dma.vmem_to_hbm [thread:$0]  %s1937, 384, %s7, [#allocation3], 384, 384, 24
    $region33: #{tpu_custom_call.1} parent=1 // pred_fallthru
      _
    // Predicated region
    $region34: #{tpu_custom_call.1} parent=1 // pred_check
      _
    $region35: #{tpu_custom_call.1} parent=1 // pred_check_branch
      %1944 = sbr.rel (0) target = $region37
    $region36: #{tpu_custom_call.1} parent=1 // pred_region
      %1945 = dma.done [#allocation3], 768
    $region37: #{tpu_custom_call.1} parent=1 // pred_fallthru
      _
    %1946 = vsyncpa [#allocation3], 1

</llo_original>
